<compile_context>
chip_gen: v5e
topology: v5e:2x2
jax: 0.10.0
libtpu: 0.0.40
codegen_flags: <defaults>
</compile_context>

<pallas_src>
import jax
import jax.numpy as jnp
from jax.experimental import pallas as pl
from jax.experimental.pallas import tpu as pltpu


# ---------------------------------------------------------------------------
# Fully fused encoder kernel:  pre -> WN layers -> proj -> sample
# layout: channels -> sublanes, time (= max_len, multiple of 128) -> lanes.
# One grid step processes one batch element.
# ---------------------------------------------------------------------------
def _make_encoder_kernel(H, C, K, n_layers, dilation_rate, T):
    dilations = [dilation_rate ** l for l in range(n_layers)]
    pads = [(K - 1) * d // 2 for d in dilations]
    assert all(p < T for p in pads), "dilated-conv padding must be < sequence length"

    f32 = jnp.float32
    bf16 = jnp.bfloat16

    def shifted(h_bf, s):
        # tap[:, t] = h[:, t - s], zero outside [0, T)  (static shift s)
        if s == 0:
            return h_bf
        if s > 0:
            pad = jnp.zeros((H, s), bf16)
            return jnp.concatenate([pad, h_bf[:, :T - s]], axis=1)
        pad = jnp.zeros((H, -s), bf16)
        return jnp.concatenate([h_bf[:, -s:], pad], axis=1)

    def kernel(x_ref, mask_ref, eps_ref, pre_w_ref, pre_b_ref, cb_ref,
               in_w_ref, rs_w_ref, rs_last_w_ref, proj_w_ref, proj_b_ref,
               z_ref, m_ref, logs_ref):
        mask = mask_ref[0]                                     # (1, T) f32
        x = x_ref[0]                                           # (Cin, T) bf16

        # ---- pre: 1x1 conv (+ mask) ----------------------------------------
        h = (jnp.dot(pre_w_ref[...], x, preferred_element_type=f32)
             + pre_b_ref[...]) * mask                          # (H, T) f32

        cb_all = cb_ref[0]                                     # (2H, L) lane-dense

        # ---- WN layers: statically unrolled, state resident in VMEM --------
        skip = None
        for l in range(n_layers):
            d, p = dilations[l], pads[l]
            h_bf = h.astype(bf16)
            # "same"-padded dilated conv: need h[:, t + k*d - p]  ->  shift p-k*d
            taps = [shifted(h_bf, p - k * d) for k in range(K)]
            stacked = jnp.concatenate(taps, axis=0)            # (K*H, T) bf16
            # single K*H-deep MXU contraction; cond(g)+conv-bias folded in cb.
            pre_act = (jnp.dot(in_w_ref[l], stacked, preferred_element_type=f32)
                       + cb_all[:, l:l + 1])                   # (2H, T) f32
            acts = jnp.tanh(pre_act[:H]) * jax.nn.sigmoid(pre_act[H:])
            acts_bf = acts.astype(bf16)

            if l < n_layers - 1:
                rs = jnp.dot(rs_w_ref[l], acts_bf, preferred_element_type=f32)
                h = (h + rs[:H]) * mask                        # residual path
                skip_add = rs[H:]
            else:
                # last layer only produces the skip half -> (H,H) dot
                skip_add = jnp.dot(rs_last_w_ref[...], acts_bf,
                                   preferred_element_type=f32)
            skip = skip_add if skip is None else skip + skip_add

        # ---- proj + sampling (fused tail) -----------------------------------
        enc = (skip * mask).astype(bf16)
        stats = (jnp.dot(proj_w_ref[...], enc, preferred_element_type=f32)
                 + proj_b_ref[...]) * mask                     # (2C, T)
        m = stats[:C]
        logs = stats[C:]
        z = (m + eps_ref[0] * jnp.exp(logs)) * mask            # eps = tau*randn

        z_ref[0] = z
        m_ref[0] = m
        logs_ref[0] = logs

    return kernel


# ---------------------------------------------------------------------------
# PosteriorEncoder wrapper (parameter setup + host-side glue in plain JAX)
# ---------------------------------------------------------------------------
class PosteriorEncoderPallas:
    def __init__(self, in_channels, out_channels, hidden_channels, kernel_size,
                 dilation_rate, n_layers, gin_channels=0, seed=42):
        assert gin_channels > 0, "g conditioning is required by this forward"
        assert kernel_size % 2 == 1, "'same' padding formula assumes odd kernel"
        assert n_layers >= 2, "need at least 2 WN layers"
        assert hidden_channels % 16 == 0, "bf16 sublane packing needs H % 16 == 0"
        assert out_channels % 8 == 0, "f32 sublane split of stats needs C % 8 == 0"
        self.in_channels = in_channels
        self.out_channels = out_channels
        self.hidden = hidden_channels
        self.kernel_size = kernel_size
        self.dilation_rate = dilation_rate
        self.n_layers = n_layers
        self.gin_channels = gin_channels

        H, K, L = hidden_channels, kernel_size, n_layers
        keys = jax.random.split(jax.random.PRNGKey(seed), 4 + 2 * n_layers)
        nrm = lambda k, s: (0.1 * jax.random.normal(k, s)).astype(jnp.float32)

        # TODO(synk): synthetic weights stand in for the opaque .bmodel weights.
        # MXU operands stored in bf16; biases / tiny cond matmul kept in f32.
        self.pre_w = nrm(keys[0], (H, in_channels)).astype(jnp.bfloat16)
        self.pre_b = jnp.zeros((H, 1), jnp.float32)
        self.cond_w = nrm(keys[1], (2 * H * L, gin_channels))
        self.cond_b = jnp.zeros((2 * H * L,), jnp.float32)
        self.proj_w = nrm(keys[2], (2 * out_channels, H)).astype(jnp.bfloat16)
        self.proj_b = jnp.zeros((2 * out_channels, 1), jnp.float32)

        in_w, rs_w = [], []
        for i in range(L):
            w = nrm(keys[3 + 2 * i], (K, 2 * H, H))                 # (K, 2H, H)
            # fold the K taps into one matrix: columns [k*H:(k+1)*H] <- tap k
            in_w.append(jnp.transpose(w, (1, 0, 2)).reshape(2 * H, K * H))
            if i < L - 1:
                rs_w.append(nrm(keys[4 + 2 * i], (2 * H, H)))
            else:
                self.rs_last_w = nrm(keys[4 + 2 * i], (H, H)).astype(jnp.bfloat16)
        self.in_w = jnp.stack(in_w).astype(jnp.bfloat16)            # (L, 2H, K*H)
        self.rs_w = jnp.stack(rs_w).astype(jnp.bfloat16)            # (L-1, 2H, H)
        # TODO(synk): real per-layer in/res_skip conv biases would be packed
        # lane-dense like `cb`; the synthetic zero in-bias is folded into cb and
        # the zero res_skip bias is dropped entirely.
        self.in_b = jnp.zeros((L, 2 * H), jnp.float32)

    def __call__(self, x, x_lengths, g=None, tau=1.0, max_len=1024,
                 noise_seed=0):
        x = jnp.asarray(x, jnp.float32)
        g = jnp.asarray(g, jnp.float32)
        x_lengths = jnp.asarray(x_lengths, jnp.int32)
        B, Cin, T_in = x.shape
        H, L, K, C = self.hidden, self.n_layers, self.kernel_size, self.out_channels
        T = max_len
        assert T % 128 == 0, "max_len must be a multiple of 128 (lane width)"

        # sequence_mask(x_lengths, max_len) -> (B, 1, T)
        x_mask = (jnp.arange(T)[None, :] <
                  x_lengths[:, None]).astype(jnp.float32)[:, None, :]

        # pad / truncate x along time to max_len (host-side glue)
        if T_in < T:
            x = jnp.concatenate(
                [x, jnp.zeros((B, Cin, T - T_in), x.dtype)], axis=2)
        elif T_in > T:
            x = x[..., :T]
            print(f"===== WARNING =====: Your input ({T_in}) exceeds the length "
                  f"limit ({T}). The output is incomplete.")
        x_bf = x.astype(jnp.bfloat16)          # DMA the big input as bf16

        # conditioning conv on g (time dim == 1): tiny, lane-sparse -> plain
        # JAX einsum; fold the in-layer conv bias in, pack lane-dense (B, 2H, L).
        cond = (jnp.einsum('oc,bct->bot', self.cond_w, g)
                + self.cond_b[None, :, None])                  # (B, 2H*L, 1)
        cb = cond.reshape(B, L, 2 * H) + self.in_b[None]
        cb = jnp.transpose(cb, (0, 2, 1))                      # (B, 2H, L)

        # tau-scaled Gaussian noise generated host-side (in-kernel TPU PRNG has
        # no interpret/CPU lowering); the sampling itself stays fused in-kernel.
        eps = tau * jax.random.normal(jax.random.PRNGKey(noise_seed),
                                      (B, C, T), jnp.float32)

        # ---- VMEM budget & cost estimate ------------------------------------
        nbytes = lambda a: int(a.size) * a.dtype.itemsize
        weight_bytes = sum(nbytes(w) for w in
                           (self.pre_w, self.pre_b, self.in_w, self.rs_w,
                            self.rs_last_w, self.proj_w, self.proj_b))
        step_bytes = (Cin * T * 2 + T * 4 + C * T * 4 + 2 * H * L * 4
                      + 3 * C * T * 4)
        work_bytes = (K * H * T * 2 + 2 * (2 * H * T * 4)
                      + 4 * (H * T * 4) + 2 * C * T * 4)
        vmem_limit = int(min(max(2 * (weight_bytes + step_bytes) + work_bytes
                                 + (8 << 20), 32 << 20), 100 << 20))
        flops = B * (2 * H * Cin * T
                     + L * 2 * (2 * H) * (K * H) * T
                     + (L - 1) * 2 * (2 * H) * H * T + 2 * H * H * T
                     + 2 * (2 * C) * H * T)
        transcendentals = B * (2 * H * T * L + C * T)
        bytes_accessed = B * step_bytes + weight_bytes

        kernel = _make_encoder_kernel(H, C, K, L, self.dilation_rate, T)

        z, m, logs = pl.pallas_call(
            kernel,
            out_shape=(jax.ShapeDtypeStruct((B, C, T), jnp.float32),
                       jax.ShapeDtypeStruct((B, C, T), jnp.float32),
                       jax.ShapeDtypeStruct((B, C, T), jnp.float32)),
            grid_spec=pltpu.PrefetchScalarGridSpec(
                num_scalar_prefetch=0,
                grid=(B,),
                in_specs=[
                    pl.BlockSpec((1, Cin, T), lambda b: (b, 0, 0)),      # x (bf16)
                    pl.BlockSpec((1, 1, T), lambda b: (b, 0, 0)),        # mask
                    pl.BlockSpec((1, C, T), lambda b: (b, 0, 0)),        # eps
                    pl.BlockSpec((H, Cin), lambda b: (0, 0)),            # pre_w
                    pl.BlockSpec((H, 1), lambda b: (0, 0)),              # pre_b
                    pl.BlockSpec((1, 2 * H, L), lambda b: (b, 0, 0)),    # cond+bias
                    pl.BlockSpec((L, 2 * H, K * H), lambda b: (0, 0, 0)),  # in_w
                    pl.BlockSpec((L - 1, 2 * H, H), lambda b: (0, 0, 0)),  # rs_w
                    pl.BlockSpec((H, H), lambda b: (0, 0)),              # rs_last_w
                    pl.BlockSpec((2 * C, H), lambda b: (0, 0)),          # proj_w
                    pl.BlockSpec((2 * C, 1), lambda b: (0, 0)),          # proj_b
                ],
                out_specs=(pl.BlockSpec((1, C, T), lambda b: (b, 0, 0)),
                           pl.BlockSpec((1, C, T), lambda b: (b, 0, 0)),
                           pl.BlockSpec((1, C, T), lambda b: (b, 0, 0))),
            ),
            compiler_params=pltpu.CompilerParams(
                dimension_semantics=("parallel",),
                vmem_limit_bytes=vmem_limit),
            cost_estimate=pl.CostEstimate(flops=int(flops),
                                          transcendentals=int(transcendentals),
                                          bytes_accessed=int(bytes_accessed)),
        )(x_bf, x_mask, eps, self.pre_w, self.pre_b, cb,
          self.in_w, self.rs_w, self.rs_last_w, self.proj_w, self.proj_b)

        return z, m, logs, x_mask


if __name__ == "__main__":
    # small, forward-consistent shapes
    B, in_ch, out_ch, hid, K, dil, n_layers, gin = 2, 8, 8, 32, 5, 2, 2, 16
    max_len = 128
    T_in = 96

    key = jax.random.PRNGKey(0)
    kx, kg = jax.random.split(key, 2)
    x = jax.random.normal(kx, (B, in_ch, T_in), jnp.float32)
    x_lengths = jnp.array([96, 64], jnp.int32)
    g = jax.random.normal(kg, (B, gin, 1), jnp.float32)

    enc = PosteriorEncoderPallas(in_ch, out_ch, hid, K, dil, n_layers,
                                 gin_channels=gin)
    z, m, logs, x_mask = enc(x, x_lengths, g, tau=1.0, max_len=max_len,
                             noise_seed=123)
    jax.block_until_ready((z, m, logs, x_mask))

    assert z.shape == (B, out_ch, max_len)
    assert m.shape == (B, out_ch, max_len)
    assert logs.shape == (B, out_ch, max_len)
    assert x_mask.shape == (B, 1, max_len)
    assert bool(jnp.all(jnp.isfinite(z)))
    assert bool(jnp.all(jnp.isfinite(m)))
    assert bool(jnp.all(jnp.isfinite(logs)))
    # masked positions must be exactly zero
    assert float(jnp.abs(z * (1.0 - x_mask)).max()) == 0.0
    assert float(jnp.abs(m * (1.0 - x_mask)).max()) == 0.0
    print("KERNEL_OK")
</pallas_src>

<mosaic_0001>
module attributes {stable_mosaic.version = 11 : i64} {
  func.func @kernel(%arg0: i32, %arg1: memref<1x8x128xbf16, #tpu.memory_space<vmem>>, %arg2: memref<1x1x128xf32, #tpu.memory_space<vmem>>, %arg3: memref<1x8x128xf32, #tpu.memory_space<vmem>>, %arg4: memref<32x8xbf16, #tpu.memory_space<vmem>>, %arg5: memref<32x1xf32, #tpu.memory_space<vmem>>, %arg6: memref<1x64x2xf32, #tpu.memory_space<vmem>>, %arg7: memref<2x64x160xbf16, #tpu.memory_space<vmem>>, %arg8: memref<1x64x32xbf16, #tpu.memory_space<vmem>>, %arg9: memref<32x32xbf16, #tpu.memory_space<vmem>>, %arg10: memref<16x32xbf16, #tpu.memory_space<vmem>>, %arg11: memref<16x1xf32, #tpu.memory_space<vmem>>, %arg12: memref<1x8x128xf32, #tpu.memory_space<vmem>>, %arg13: memref<1x8x128xf32, #tpu.memory_space<vmem>>, %arg14: memref<1x8x128xf32, #tpu.memory_space<vmem>>) attributes {dimension_semantics = [#tpu.dimension_semantics<parallel>], iteration_bounds = array<i64: 2>, scalar_prefetch = 0 : i64, scratch_operands = 0 : i64, tpu.core_type = #tpu.core_type<tc>, window_params = [{transform_indices = @transform_0, window_bounds = array<i64: 1, 8, 128>}, {transform_indices = @transform_1, window_bounds = array<i64: 1, 1, 128>}, {transform_indices = @transform_2, window_bounds = array<i64: 1, 8, 128>}, {pipeline_mode = #tpu.pipeline_mode<synchronous>, transform_indices = @transform_3, window_bounds = array<i64: 32, 8>}, {pipeline_mode = #tpu.pipeline_mode<synchronous>, transform_indices = @transform_4, window_bounds = array<i64: 32, 1>}, {transform_indices = @transform_5, window_bounds = array<i64: 1, 64, 2>}, {pipeline_mode = #tpu.pipeline_mode<synchronous>, transform_indices = @transform_6, window_bounds = array<i64: 2, 64, 160>}, {pipeline_mode = #tpu.pipeline_mode<synchronous>, transform_indices = @transform_7, window_bounds = array<i64: 1, 64, 32>}, {pipeline_mode = #tpu.pipeline_mode<synchronous>, transform_indices = @transform_8, window_bounds = array<i64: 32, 32>}, {pipeline_mode = #tpu.pipeline_mode<synchronous>, transform_indices = @transform_9, window_bounds = array<i64: 16, 32>}, {pipeline_mode = #tpu.pipeline_mode<synchronous>, transform_indices = @transform_10, window_bounds = array<i64: 16, 1>}, {transform_indices = @transform_11, window_bounds = array<i64: 1, 8, 128>}, {transform_indices = @transform_12, window_bounds = array<i64: 1, 8, 128>}, {transform_indices = @transform_13, window_bounds = array<i64: 1, 8, 128>}]} {
    %c0 = arith.constant 0 : index
    %c0_0 = arith.constant 0 : index
    %c0_1 = arith.constant 0 : index
    %0 = vector.load %arg2[%c0, %c0_0, %c0_1] : memref<1x1x128xf32, #tpu.memory_space<vmem>>, vector<1x1x128xf32>
    %1 = vector.shape_cast %0 : vector<1x1x128xf32> to vector<1x128xf32>
    %c0_2 = arith.constant 0 : index
    %c0_3 = arith.constant 0 : index
    %c0_4 = arith.constant 0 : index
    %2 = vector.load %arg1[%c0_2, %c0_3, %c0_4] : memref<1x8x128xbf16, #tpu.memory_space<vmem>>, vector<1x8x128xbf16>
    %3 = vector.shape_cast %2 : vector<1x8x128xbf16> to vector<8x128xbf16>
    %c0_5 = arith.constant 0 : index
    %c0_6 = arith.constant 0 : index
    %4 = vector.load %arg4[%c0_5, %c0_6] : memref<32x8xbf16, #tpu.memory_space<vmem>>, vector<32x8xbf16>
    %cst = arith.constant dense<0.000000e+00> : vector<32x128xf32>
    %5 = tpu.matmul %4, %3, %cst {dimension_numbers = #tpu.dot_dimension_numbers<[1], [0], [0], [1], [0, 0, 1, 1], [], []>} : vector<32x8xbf16>, vector<8x128xbf16>, vector<32x128xf32> -> vector<32x128xf32>
    %c0_7 = arith.constant 0 : index
    %c0_8 = arith.constant 0 : index
    %6 = vector.load %arg5[%c0_7, %c0_8] : memref<32x1xf32, #tpu.memory_space<vmem>>, vector<32x1xf32>
    %7 = vector.broadcast %6 : vector<32x1xf32> to vector<32x128xf32>
    %8 = arith.addf %5, %7 : vector<32x128xf32>
    %9 = vector.broadcast %1 : vector<1x128xf32> to vector<32x128xf32>
    %10 = arith.mulf %8, %9 : vector<32x128xf32>
    %c0_9 = arith.constant 0 : index
    %c0_10 = arith.constant 0 : index
    %c0_11 = arith.constant 0 : index
    %11 = vector.load %arg6[%c0_9, %c0_10, %c0_11] : memref<1x64x2xf32, #tpu.memory_space<vmem>>, vector<1x64x2xf32>
    %12 = vector.shape_cast %11 : vector<1x64x2xf32> to vector<64x2xf32>
    %13 = arith.truncf %10 : vector<32x128xf32> to vector<32x128xbf16>
    %cst_12 = arith.constant 0.000000e+00 : bf16
    %14 = vector.broadcast %cst_12 : bf16 to vector<32x2xbf16>
    %15 = vector.extract_strided_slice %13 {offsets = [0, 0], sizes = [32, 126], strides = [1, 1]} : vector<32x128xbf16> to vector<32x126xbf16>
    %16 = tpu.concatenate %14, %15 in 1 : vector<32x2xbf16>, vector<32x126xbf16> -> vector<32x128xbf16>
    %cst_13 = arith.constant 0.000000e+00 : bf16
    %17 = vector.broadcast %cst_13 : bf16 to vector<32x1xbf16>
    %18 = vector.extract_strided_slice %13 {offsets = [0, 0], sizes = [32, 127], strides = [1, 1]} : vector<32x128xbf16> to vector<32x127xbf16>
    %19 = tpu.concatenate %17, %18 in 1 : vector<32x1xbf16>, vector<32x127xbf16> -> vector<32x128xbf16>
    %cst_14 = arith.constant 0.000000e+00 : bf16
    %20 = vector.broadcast %cst_14 : bf16 to vector<32x1xbf16>
    %21 = vector.extract_strided_slice %13 {offsets = [0, 1], sizes = [32, 127], strides = [1, 1]} : vector<32x128xbf16> to vector<32x127xbf16>
    %22 = tpu.concatenate %21, %20 in 1 : vector<32x127xbf16>, vector<32x1xbf16> -> vector<32x128xbf16>
    %cst_15 = arith.constant 0.000000e+00 : bf16
    %23 = vector.broadcast %cst_15 : bf16 to vector<32x2xbf16>
    %24 = vector.extract_strided_slice %13 {offsets = [0, 2], sizes = [32, 126], strides = [1, 1]} : vector<32x128xbf16> to vector<32x126xbf16>
    %25 = tpu.concatenate %24, %23 in 1 : vector<32x126xbf16>, vector<32x2xbf16> -> vector<32x128xbf16>
    %26 = tpu.concatenate %16, %19, %13, %22, %25 in 0 : vector<32x128xbf16>, vector<32x128xbf16>, vector<32x128xbf16>, vector<32x128xbf16>, vector<32x128xbf16> -> vector<160x128xbf16>
    %c0_16 = arith.constant 0 : index
    %c0_17 = arith.constant 0 : index
    %c0_18 = arith.constant 0 : index
    %27 = vector.load %arg7[%c0_16, %c0_17, %c0_18] : memref<2x64x160xbf16, #tpu.memory_space<vmem>>, vector<1x64x160xbf16>
    %28 = vector.shape_cast %27 : vector<1x64x160xbf16> to vector<64x160xbf16>
    %cst_19 = arith.constant dense<0.000000e+00> : vector<64x128xf32>
    %29 = tpu.matmul %28, %26, %cst_19 {dimension_numbers = #tpu.dot_dimension_numbers<[1], [0], [0], [1], [0, 0, 1, 1], [], []>} : vector<64x160xbf16>, vector<160x128xbf16>, vector<64x128xf32> -> vector<64x128xf32>
    %30 = vector.extract_strided_slice %12 {offsets = [0, 0], sizes = [64, 1], strides = [1, 1]} : vector<64x2xf32> to vector<64x1xf32>
    %31 = vector.broadcast %30 : vector<64x1xf32> to vector<64x128xf32>
    %32 = arith.addf %29, %31 : vector<64x128xf32>
    %33 = vector.extract_strided_slice %32 {offsets = [0, 0], sizes = [32, 128], strides = [1, 1]} : vector<64x128xf32> to vector<32x128xf32>
    %34 = math.tanh %33 : vector<32x128xf32>
    %35 = vector.extract_strided_slice %32 {offsets = [32, 0], sizes = [32, 128], strides = [1, 1]} : vector<64x128xf32> to vector<32x128xf32>
    %36 = arith.negf %35 : vector<32x128xf32>
    %37 = math.exp %36 : vector<32x128xf32>
    %cst_20 = arith.constant 1.000000e+00 : f32
    %38 = vector.broadcast %cst_20 : f32 to vector<32x128xf32>
    %39 = arith.addf %38, %37 : vector<32x128xf32>
    %40 = arith.divf %38, %39 : vector<32x128xf32>
    %41 = arith.mulf %34, %40 : vector<32x128xf32>
    %42 = arith.truncf %41 : vector<32x128xf32> to vector<32x128xbf16>
    %c0_21 = arith.constant 0 : index
    %c0_22 = arith.constant 0 : index
    %c0_23 = arith.constant 0 : index
    %43 = vector.load %arg8[%c0_21, %c0_22, %c0_23] : memref<1x64x32xbf16, #tpu.memory_space<vmem>>, vector<1x64x32xbf16>
    %44 = vector.shape_cast %43 : vector<1x64x32xbf16> to vector<64x32xbf16>
    %cst_24 = arith.constant dense<0.000000e+00> : vector<64x128xf32>
    %45 = tpu.matmul %44, %42, %cst_24 {dimension_numbers = #tpu.dot_dimension_numbers<[1], [0], [0], [1], [0, 0, 1, 1], [], []>} : vector<64x32xbf16>, vector<32x128xbf16>, vector<64x128xf32> -> vector<64x128xf32>
    %46 = vector.extract_strided_slice %45 {offsets = [0, 0], sizes = [32, 128], strides = [1, 1]} : vector<64x128xf32> to vector<32x128xf32>
    %47 = arith.addf %10, %46 : vector<32x128xf32>
    %48 = vector.broadcast %1 : vector<1x128xf32> to vector<32x128xf32>
    %49 = arith.mulf %47, %48 : vector<32x128xf32>
    %50 = vector.extract_strided_slice %45 {offsets = [32, 0], sizes = [32, 128], strides = [1, 1]} : vector<64x128xf32> to vector<32x128xf32>
    %51 = arith.truncf %49 : vector<32x128xf32> to vector<32x128xbf16>
    %cst_25 = arith.constant 0.000000e+00 : bf16
    %52 = vector.broadcast %cst_25 : bf16 to vector<32x4xbf16>
    %53 = vector.extract_strided_slice %51 {offsets = [0, 0], sizes = [32, 124], strides = [1, 1]} : vector<32x128xbf16> to vector<32x124xbf16>
    %54 = tpu.concatenate %52, %53 in 1 : vector<32x4xbf16>, vector<32x124xbf16> -> vector<32x128xbf16>
    %cst_26 = arith.constant 0.000000e+00 : bf16
    %55 = vector.broadcast %cst_26 : bf16 to vector<32x2xbf16>
    %56 = vector.extract_strided_slice %51 {offsets = [0, 0], sizes = [32, 126], strides = [1, 1]} : vector<32x128xbf16> to vector<32x126xbf16>
    %57 = tpu.concatenate %55, %56 in 1 : vector<32x2xbf16>, vector<32x126xbf16> -> vector<32x128xbf16>
    %cst_27 = arith.constant 0.000000e+00 : bf16
    %58 = vector.broadcast %cst_27 : bf16 to vector<32x2xbf16>
    %59 = vector.extract_strided_slice %51 {offsets = [0, 2], sizes = [32, 126], strides = [1, 1]} : vector<32x128xbf16> to vector<32x126xbf16>
    %60 = tpu.concatenate %59, %58 in 1 : vector<32x126xbf16>, vector<32x2xbf16> -> vector<32x128xbf16>
    %cst_28 = arith.constant 0.000000e+00 : bf16
    %61 = vector.broadcast %cst_28 : bf16 to vector<32x4xbf16>
    %62 = vector.extract_strided_slice %51 {offsets = [0, 4], sizes = [32, 124], strides = [1, 1]} : vector<32x128xbf16> to vector<32x124xbf16>
    %63 = tpu.concatenate %62, %61 in 1 : vector<32x124xbf16>, vector<32x4xbf16> -> vector<32x128xbf16>
    %64 = tpu.concatenate %54, %57, %51, %60, %63 in 0 : vector<32x128xbf16>, vector<32x128xbf16>, vector<32x128xbf16>, vector<32x128xbf16>, vector<32x128xbf16> -> vector<160x128xbf16>
    %c1 = arith.constant 1 : index
    %c0_29 = arith.constant 0 : index
    %c0_30 = arith.constant 0 : index
    %65 = vector.load %arg7[%c1, %c0_29, %c0_30] : memref<2x64x160xbf16, #tpu.memory_space<vmem>>, vector<1x64x160xbf16>
    %66 = vector.shape_cast %65 : vector<1x64x160xbf16> to vector<64x160xbf16>
    %cst_31 = arith.constant dense<0.000000e+00> : vector<64x128xf32>
    %67 = tpu.matmul %66, %64, %cst_31 {dimension_numbers = #tpu.dot_dimension_numbers<[1], [0], [0], [1], [0, 0, 1, 1], [], []>} : vector<64x160xbf16>, vector<160x128xbf16>, vector<64x128xf32> -> vector<64x128xf32>
    %68 = vector.extract_strided_slice %12 {offsets = [0, 1], sizes = [64, 1], strides = [1, 1]} : vector<64x2xf32> to vector<64x1xf32>
    %69 = vector.broadcast %68 : vector<64x1xf32> to vector<64x128xf32>
    %70 = arith.addf %67, %69 : vector<64x128xf32>
    %71 = vector.extract_strided_slice %70 {offsets = [0, 0], sizes = [32, 128], strides = [1, 1]} : vector<64x128xf32> to vector<32x128xf32>
    %72 = math.tanh %71 : vector<32x128xf32>
    %73 = vector.extract_strided_slice %70 {offsets = [32, 0], sizes = [32, 128], strides = [1, 1]} : vector<64x128xf32> to vector<32x128xf32>
    %74 = arith.negf %73 : vector<32x128xf32>
    %75 = math.exp %74 : vector<32x128xf32>
    %cst_32 = arith.constant 1.000000e+00 : f32
    %76 = vector.broadcast %cst_32 : f32 to vector<32x128xf32>
    %77 = arith.addf %76, %75 : vector<32x128xf32>
    %78 = arith.divf %76, %77 : vector<32x128xf32>
    %79 = arith.mulf %72, %78 : vector<32x128xf32>
    %80 = arith.truncf %79 : vector<32x128xf32> to vector<32x128xbf16>
    %c0_33 = arith.constant 0 : index
    %c0_34 = arith.constant 0 : index
    %81 = vector.load %arg9[%c0_33, %c0_34] : memref<32x32xbf16, #tpu.memory_space<vmem>>, vector<32x32xbf16>
    %cst_35 = arith.constant dense<0.000000e+00> : vector<32x128xf32>
    %82 = tpu.matmul %81, %80, %cst_35 {dimension_numbers = #tpu.dot_dimension_numbers<[1], [0], [0], [1], [0, 0, 1, 1], [], []>} : vector<32x32xbf16>, vector<32x128xbf16>, vector<32x128xf32> -> vector<32x128xf32>
    %83 = arith.addf %50, %82 : vector<32x128xf32>
    %84 = vector.broadcast %1 : vector<1x128xf32> to vector<32x128xf32>
    %85 = arith.mulf %83, %84 : vector<32x128xf32>
    %86 = arith.truncf %85 : vector<32x128xf32> to vector<32x128xbf16>
    %c0_36 = arith.constant 0 : index
    %c0_37 = arith.constant 0 : index
    %87 = vector.load %arg10[%c0_36, %c0_37] : memref<16x32xbf16, #tpu.memory_space<vmem>>, vector<16x32xbf16>
    %cst_38 = arith.constant dense<0.000000e+00> : vector<16x128xf32>
    %88 = tpu.matmul %87, %86, %cst_38 {dimension_numbers = #tpu.dot_dimension_numbers<[1], [0], [0], [1], [0, 0, 1, 1], [], []>} : vector<16x32xbf16>, vector<32x128xbf16>, vector<16x128xf32> -> vector<16x128xf32>
    %c0_39 = arith.constant 0 : index
    %c0_40 = arith.constant 0 : index
    %89 = vector.load %arg11[%c0_39, %c0_40] : memref<16x1xf32, #tpu.memory_space<vmem>>, vector<16x1xf32>
    %90 = vector.broadcast %89 : vector<16x1xf32> to vector<16x128xf32>
    %91 = arith.addf %88, %90 : vector<16x128xf32>
    %92 = vector.broadcast %1 : vector<1x128xf32> to vector<16x128xf32>
    %93 = arith.mulf %91, %92 : vector<16x128xf32>
    %94 = vector.extract_strided_slice %93 {offsets = [0, 0], sizes = [8, 128], strides = [1, 1]} : vector<16x128xf32> to vector<8x128xf32>
    %95 = vector.extract_strided_slice %93 {offsets = [8, 0], sizes = [8, 128], strides = [1, 1]} : vector<16x128xf32> to vector<8x128xf32>
    %c0_41 = arith.constant 0 : index
    %c0_42 = arith.constant 0 : index
    %c0_43 = arith.constant 0 : index
    %96 = vector.load %arg3[%c0_41, %c0_42, %c0_43] : memref<1x8x128xf32, #tpu.memory_space<vmem>>, vector<1x8x128xf32>
    %97 = vector.shape_cast %96 : vector<1x8x128xf32> to vector<8x128xf32>
    %98 = math.exp %95 : vector<8x128xf32>
    %99 = arith.mulf %97, %98 : vector<8x128xf32>
    %100 = arith.addf %94, %99 : vector<8x128xf32>
    %101 = vector.broadcast %1 : vector<1x128xf32> to vector<8x128xf32>
    %102 = arith.mulf %100, %101 : vector<8x128xf32>
    %c0_44 = arith.constant 0 : index
    %c0_45 = arith.constant 0 : index
    %c0_46 = arith.constant 0 : index
    %103 = vector.load %arg12[%c0_44, %c0_45, %c0_46] : memref<1x8x128xf32, #tpu.memory_space<vmem>>, vector<1x8x128xf32>
    %104 = vector.shape_cast %103 : vector<1x8x128xf32> to vector<8x128xf32>
    %105 = vector.shape_cast %102 : vector<8x128xf32> to vector<1x8x128xf32>
    tpu.vector_store %arg12[%c0_44, %c0_45, %c0_46], %105 {strides = array<i32>} : memref<1x8x128xf32, #tpu.memory_space<vmem>>, vector<1x8x128xf32>,
    %c0_47 = arith.constant 0 : index
    %c0_48 = arith.constant 0 : index
    %c0_49 = arith.constant 0 : index
    %106 = vector.load %arg13[%c0_47, %c0_48, %c0_49] : memref<1x8x128xf32, #tpu.memory_space<vmem>>, vector<1x8x128xf32>
    %107 = vector.shape_cast %106 : vector<1x8x128xf32> to vector<8x128xf32>
    %108 = vector.shape_cast %94 : vector<8x128xf32> to vector<1x8x128xf32>
    tpu.vector_store %arg13[%c0_47, %c0_48, %c0_49], %108 {strides = array<i32>} : memref<1x8x128xf32, #tpu.memory_space<vmem>>, vector<1x8x128xf32>,
    %c0_50 = arith.constant 0 : index
    %c0_51 = arith.constant 0 : index
    %c0_52 = arith.constant 0 : index
    %109 = vector.load %arg14[%c0_50, %c0_51, %c0_52] : memref<1x8x128xf32, #tpu.memory_space<vmem>>, vector<1x8x128xf32>
    %110 = vector.shape_cast %109 : vector<1x8x128xf32> to vector<8x128xf32>
    %111 = vector.shape_cast %95 : vector<8x128xf32> to vector<1x8x128xf32>
    tpu.vector_store %arg14[%c0_50, %c0_51, %c0_52], %111 {strides = array<i32>} : memref<1x8x128xf32, #tpu.memory_space<vmem>>, vector<1x8x128xf32>,
    return
  }
  func.func @transform_0(%arg0: i32) -> (i32, i32, i32) {
    %c0_i32 = arith.constant 0 : i32
    %c0_i32_0 = arith.constant 0 : i32
    %c0_i32_1 = arith.constant 0 : i32
    return %arg0, %c0_i32, %c0_i32_0 : i32, i32, i32
  }
  func.func @transform_1(%arg0: i32) -> (i32, i32, i32) {
    %c0_i32 = arith.constant 0 : i32
    %c0_i32_0 = arith.constant 0 : i32
    %c0_i32_1 = arith.constant 0 : i32
    return %arg0, %c0_i32, %c0_i32_0 : i32, i32, i32
  }
  func.func @transform_2(%arg0: i32) -> (i32, i32, i32) {
    %c0_i32 = arith.constant 0 : i32
    %c0_i32_0 = arith.constant 0 : i32
    %c0_i32_1 = arith.constant 0 : i32
    return %arg0, %c0_i32, %c0_i32_0 : i32, i32, i32
  }
  func.func @transform_3(%arg0: i32) -> (i32, i32) {
    %c0_i32 = arith.constant 0 : i32
    %c0_i32_0 = arith.constant 0 : i32
    %c0_i32_1 = arith.constant 0 : i32
    return %c0_i32, %c0_i32_0 : i32, i32
  }
  func.func @transform_4(%arg0: i32) -> (i32, i32) {
    %c0_i32 = arith.constant 0 : i32
    %c0_i32_0 = arith.constant 0 : i32
    %c0_i32_1 = arith.constant 0 : i32
    return %c0_i32, %c0_i32_0 : i32, i32
  }
  func.func @transform_5(%arg0: i32) -> (i32, i32, i32) {
    %c0_i32 = arith.constant 0 : i32
    %c0_i32_0 = arith.constant 0 : i32
    %c0_i32_1 = arith.constant 0 : i32
    return %arg0, %c0_i32, %c0_i32_0 : i32, i32, i32
  }
  func.func @transform_6(%arg0: i32) -> (i32, i32, i32) {
    %c0_i32 = arith.constant 0 : i32
    %c0_i32_0 = arith.constant 0 : i32
    %c0_i32_1 = arith.constant 0 : i32
    %c0_i32_2 = arith.constant 0 : i32
    return %c0_i32, %c0_i32_0, %c0_i32_1 : i32, i32, i32
  }
  func.func @transform_7(%arg0: i32) -> (i32, i32, i32) {
    %c0_i32 = arith.constant 0 : i32
    %c0_i32_0 = arith.constant 0 : i32
    %c0_i32_1 = arith.constant 0 : i32
    %c0_i32_2 = arith.constant 0 : i32
    return %c0_i32, %c0_i32_0, %c0_i32_1 : i32, i32, i32
  }
  func.func @transform_8(%arg0: i32) -> (i32, i32) {
    %c0_i32 = arith.constant 0 : i32
    %c0_i32_0 = arith.constant 0 : i32
    %c0_i32_1 = arith.constant 0 : i32
    return %c0_i32, %c0_i32_0 : i32, i32
  }
  func.func @transform_9(%arg0: i32) -> (i32, i32) {
    %c0_i32 = arith.constant 0 : i32
    %c0_i32_0 = arith.constant 0 : i32
    %c0_i32_1 = arith.constant 0 : i32
    return %c0_i32, %c0_i32_0 : i32, i32
  }
  func.func @transform_10(%arg0: i32) -> (i32, i32) {
    %c0_i32 = arith.constant 0 : i32
    %c0_i32_0 = arith.constant 0 : i32
    %c0_i32_1 = arith.constant 0 : i32
    return %c0_i32, %c0_i32_0 : i32, i32
  }
  func.func @transform_11(%arg0: i32) -> (i32, i32, i32) {
    %c0_i32 = arith.constant 0 : i32
    %c0_i32_0 = arith.constant 0 : i32
    %c0_i32_1 = arith.constant 0 : i32
    return %arg0, %c0_i32, %c0_i32_0 : i32, i32, i32
  }
  func.func @transform_12(%arg0: i32) -> (i32, i32, i32) {
    %c0_i32 = arith.constant 0 : i32
    %c0_i32_0 = arith.constant 0 : i32
    %c0_i32_1 = arith.constant 0 : i32
    return %arg0, %c0_i32, %c0_i32_0 : i32, i32, i32
  }
  func.func @transform_13(%arg0: i32) -> (i32, i32, i32) {
    %c0_i32 = arith.constant 0 : i32
    %c0_i32_0 = arith.constant 0 : i32
    %c0_i32_1 = arith.constant 0 : i32
    return %arg0, %c0_i32, %c0_i32_0 : i32, i32, i32
  }
}

</mosaic_0001>

<llo_original>
// kernel: tpu_custom_call.1
$region0: #{tpu_custom_call.1}
  #allocation0 [shape = 'u32[]', space=smem, size = 0x4, offset = 0x4, fixed_abs, tag = 'smem constant byte address 0x4 - core index']
  #allocation1 [shape = 'u32[72,128]{1,0:T(1,128)}', space=vmem, size = 0x9000, scoped, tag = 'internal scratch']
  %s0 = inlined_call_operand.vmem [shape: bf16[2,8,128], index: 0, kind: input, shape index: {}]
  %s1 = inlined_call_operand.vmem [shape: f32[2,1,128], index: 1, kind: input, shape index: {}]
  %s2 = inlined_call_operand.vmem [shape: f32[2,8,128], index: 2, kind: input, shape index: {}]
  %s3 = inlined_call_operand.vmem [shape: bf16[32,8], index: 3, kind: input, shape index: {}]
  %s4 = inlined_call_operand.vmem [shape: f32[32,1], index: 4, kind: input, shape index: {}]
  %s5 = inlined_call_operand.vmem [shape: f32[2,64,2], index: 5, kind: input, shape index: {}]
  %s6 = inlined_call_operand.vmem [shape: bf16[2,64,160], index: 6, kind: input, shape index: {}]
  %s7 = inlined_call_operand.vmem [shape: bf16[1,64,32], index: 7, kind: input, shape index: {}]
  %s8 = inlined_call_operand.vmem [shape: bf16[32,32], index: 8, kind: input, shape index: {}]
  %s9 = inlined_call_operand.vmem [shape: bf16[16,32], index: 9, kind: input, shape index: {}]
  %s10 = inlined_call_operand.vmem [shape: f32[16,1], index: 10, kind: input, shape index: {}]
  %s11 = inlined_call_operand.hbm [shape: f32[2,8,128], index: 11, kind: output, shape index: {0}]
  %s12 = inlined_call_operand.hbm [shape: f32[2,8,128], index: 12, kind: output, shape index: {1}]
  %s13 = inlined_call_operand.hbm [shape: f32[2,8,128], index: 13, kind: output, shape index: {2}]
  %14 = xla_tuple %s11, %s12, %s13
  %s15 = sld [smem:[#allocation0]]
  $region93: #{tpu_custom_call.1} parent=0
    _
  %s17 = ssub.s32 1, %s15
  %s18 = scalar_select 0, %s17, %s15
  $region1: #{tpu_custom_call.1} parent=0
    #allocation2 [shape = 'u8[8192]{0}', space=vmem, size = 0x2000, scoped, tag = 'output window, operand 0']
    #allocation3 [shape = 's32[2]{0}', space=sflag, size = 0x8, scoped, tag = 'scoped memory for tpu_custom_call.1']
    #allocation4 [shape = 'u8[8192]{0}', space=vmem, size = 0x2000, scoped, tag = 'output window, operand 1']
    #allocation5 [shape = 's32[2]{0}', space=sflag, size = 0x8, scoped, tag = 'scoped memory for tpu_custom_call.1']
    #allocation6 [shape = 'u8[8192]{0}', space=vmem, size = 0x2000, scoped, tag = 'output window, operand 2']
    %19 = vsyncpa [#allocation3], 0
    %s20 = scalar_lea.sflag [#allocation3], 1
    %21 = vsyncpa %s20, 0
    %22 = vsyncpa [#allocation5], 0
    %s23 = scalar_lea.sflag [#allocation5], 1
    %24 = vsyncpa %s23, 0
    loop: start=0, step=1, limit=4
    $region2: #{tpu_custom_call.1} parent=1 // loop_pre_header
      _
    $region3: #{tpu_custom_call.1} parent=1 // loop_header
      %s26 = sphi 0, %s30
      %p27 = scmp.ge.s32.totalorder %s26, 4
      %s36 = sphi 0, %s38
      %s39 = sphi 0, %s36
      %s40 = sphi 0, %s39
      %s56 = sphi 0, %s40
      %s62 = sphi 0, %s64
      %s65 = sphi 0, %s62
      %s66 = sphi 0, %s65
      %s82 = sphi 0, %s66
      %s88 = sphi 0, %s90
      %s91 = sphi 0, %s88
      %s92 = sphi 0, %s91
      %s108 = sphi 0, %s92
      %s112 = sphi 0, %s112
      %s114 = sphi 0, %s112
      %s115 = sphi 0, %s114
      %s129 = sphi 0, %s115
      %s133 = sphi 0, %s133
      %s135 = sphi 0, %s133
      %s136 = sphi 0, %s135
      %s150 = sphi 0, %s136
      %s156 = sphi 0, %s158
      %s159 = sphi 0, %s156
      %s160 = sphi 0, %s159
      %s176 = sphi 0, %s160
      %s180 = sphi 0, %s180
      %s182 = sphi 0, %s180
      %s183 = sphi 0, %s182
      %s197 = sphi 0, %s183
      %s201 = sphi 0, %s201
      %s203 = sphi 0, %s201
      %s204 = sphi 0, %s203
      %s218 = sphi 0, %s204
      %s222 = sphi 0, %s222
      %s224 = sphi 0, %s222
      %s225 = sphi 0, %s224
      %s239 = sphi 0, %s225
      %s243 = sphi 0, %s243
      %s245 = sphi 0, %s243
      %s246 = sphi 0, %s245
      %s260 = sphi 0, %s246
      %s264 = sphi 0, %s264
      %s266 = sphi 0, %s264
      %s267 = sphi 0, %s266
      %s281 = sphi 0, %s267
      %s287 = sphi 0, %s289
      %s290 = sphi 0, %s287
      %s291 = sphi 0, %s290
      %s307 = sphi 0, %s291
      %s313 = sphi 0, %s315
      %s316 = sphi 0, %s313
      %s317 = sphi 0, %s316
      %s333 = sphi 0, %s317
      %s339 = sphi 0, %s341
      %s342 = sphi 0, %s339
      %s343 = sphi 0, %s342
      %s359 = sphi 0, %s343
    $region4: #{tpu_custom_call.1} parent=1 // loop_header_branch
      %29 = sbr.rel (%p27) target = $region8
    $region5: #{tpu_custom_call.1} parent=1 // loop_body
      %s31 = ssub.s32 %s26, 1
      %s32 = ssub.s32 %s26, 2
      %s33 = sadd.s32 %s26, 1
      %s34 = ssub.s32 %s26, %s33
      %p35 = scmp.eq.s32.totalorder %s34, 0
      %s37 = sadd.s32 %s36, 1
      %s38 = scalar_select %p35, %s36, %s37
      %p41 = pneg %p35
      %p42 = scmp.eq.s32.totalorder %s26, 1
      %p43 = por %p41, %p42
      %p44 = scmp.ne.s32.totalorder %s36, %s39
      %p45 = scmp.eq.s32.totalorder %s26, 0
      %p46 = por %p44, %p45
      %p47 = scmp.ne.s32.totalorder %s36, %s39
      %p48 = scmp.eq.s32.totalorder %s31, 1
      %p49 = por %p47, %p48
      %p50 = scmp.ne.s32.totalorder %s39, %s40
      %p51 = scmp.eq.s32.totalorder %s31, 0
      %p52 = por %p50, %p51
      %p53 = scmp.ne.s32.totalorder %s39, %s40
      %p54 = scmp.eq.s32.totalorder %s32, 1
      %p55 = por %p53, %p54
      %p57 = scmp.ne.s32.totalorder %s40, %s56
      %p58 = scmp.eq.s32.totalorder %s32, 0
      %p59 = por %p57, %p58
      %s60 = ssub.s32 %s26, %s33
      %p61 = scmp.eq.s32.totalorder %s60, 0
      %s63 = sadd.s32 %s62, 1
      %s64 = scalar_select %p61, %s62, %s63
      %p67 = pneg %p61
      %p68 = scmp.eq.s32.totalorder %s26, 1
      %p69 = por %p67, %p68
      %p70 = scmp.ne.s32.totalorder %s62, %s65
      %p71 = scmp.eq.s32.totalorder %s26, 0
      %p72 = por %p70, %p71
      %p73 = scmp.ne.s32.totalorder %s62, %s65
      %p74 = scmp.eq.s32.totalorder %s31, 1
      %p75 = por %p73, %p74
      %p76 = scmp.ne.s32.totalorder %s65, %s66
      %p77 = scmp.eq.s32.totalorder %s31, 0
      %p78 = por %p76, %p77
      %p79 = scmp.ne.s32.totalorder %s65, %s66
      %p80 = scmp.eq.s32.totalorder %s32, 1
      %p81 = por %p79, %p80
      %p83 = scmp.ne.s32.totalorder %s66, %s82
      %p84 = scmp.eq.s32.totalorder %s32, 0
      %p85 = por %p83, %p84
      %s86 = ssub.s32 %s26, %s33
      %p87 = scmp.eq.s32.totalorder %s86, 0
      %s89 = sadd.s32 %s88, 1
      %s90 = scalar_select %p87, %s88, %s89
      %p93 = pneg %p87
      %p94 = scmp.eq.s32.totalorder %s26, 1
      %p95 = por %p93, %p94
      %p96 = scmp.ne.s32.totalorder %s88, %s91
      %p97 = scmp.eq.s32.totalorder %s26, 0
      %p98 = por %p96, %p97
      %p99 = scmp.ne.s32.totalorder %s88, %s91
      %p100 = scmp.eq.s32.totalorder %s31, 1
      %p101 = por %p99, %p100
      %p102 = scmp.ne.s32.totalorder %s91, %s92
      %p103 = scmp.eq.s32.totalorder %s31, 0
      %p104 = por %p102, %p103
      %p105 = scmp.ne.s32.totalorder %s91, %s92
      %p106 = scmp.eq.s32.totalorder %s32, 1
      %p107 = por %p105, %p106
      %p109 = scmp.ne.s32.totalorder %s92, %s108
      %p110 = scmp.eq.s32.totalorder %s32, 0
      %p111 = por %p109, %p110
      %s113 = sadd.s32 %s112, 1
      %p116 = scmp.eq.s32.totalorder %s26, 1
      %p117 = scmp.ne.s32.totalorder %s112, %s114
      %p118 = scmp.eq.s32.totalorder %s26, 0
      %p119 = por %p117, %p118
      %p120 = scmp.ne.s32.totalorder %s112, %s114
      %p121 = scmp.eq.s32.totalorder %s31, 1
      %p122 = por %p120, %p121
      %p123 = scmp.ne.s32.totalorder %s114, %s115
      %p124 = scmp.eq.s32.totalorder %s31, 0
      %p125 = por %p123, %p124
      %p126 = scmp.ne.s32.totalorder %s114, %s115
      %p127 = scmp.eq.s32.totalorder %s32, 1
      %p128 = por %p126, %p127
      %p130 = scmp.ne.s32.totalorder %s115, %s129
      %p131 = scmp.eq.s32.totalorder %s32, 0
      %p132 = por %p130, %p131
      %s134 = sadd.s32 %s133, 1
      %p137 = scmp.eq.s32.totalorder %s26, 1
      %p138 = scmp.ne.s32.totalorder %s133, %s135
      %p139 = scmp.eq.s32.totalorder %s26, 0
      %p140 = por %p138, %p139
      %p141 = scmp.ne.s32.totalorder %s133, %s135
      %p142 = scmp.eq.s32.totalorder %s31, 1
      %p143 = por %p141, %p142
      %p144 = scmp.ne.s32.totalorder %s135, %s136
      %p145 = scmp.eq.s32.totalorder %s31, 0
      %p146 = por %p144, %p145
      %p147 = scmp.ne.s32.totalorder %s135, %s136
      %p148 = scmp.eq.s32.totalorder %s32, 1
      %p149 = por %p147, %p148
      %p151 = scmp.ne.s32.totalorder %s136, %s150
      %p152 = scmp.eq.s32.totalorder %s32, 0
      %p153 = por %p151, %p152
      %s154 = ssub.s32 %s26, %s33
      %p155 = scmp.eq.s32.totalorder %s154, 0
      %s157 = sadd.s32 %s156, 1
      %s158 = scalar_select %p155, %s156, %s157
      %p161 = pneg %p155
      %p162 = scmp.eq.s32.totalorder %s26, 1
      %p163 = por %p161, %p162
      %p164 = scmp.ne.s32.totalorder %s156, %s159
      %p165 = scmp.eq.s32.totalorder %s26, 0
      %p166 = por %p164, %p165
      %p167 = scmp.ne.s32.totalorder %s156, %s159
      %p168 = scmp.eq.s32.totalorder %s31, 1
      %p169 = por %p167, %p168
      %p170 = scmp.ne.s32.totalorder %s159, %s160
      %p171 = scmp.eq.s32.totalorder %s31, 0
      %p172 = por %p170, %p171
      %p173 = scmp.ne.s32.totalorder %s159, %s160
      %p174 = scmp.eq.s32.totalorder %s32, 1
      %p175 = por %p173, %p174
      %p177 = scmp.ne.s32.totalorder %s160, %s176
      %p178 = scmp.eq.s32.totalorder %s32, 0
      %p179 = por %p177, %p178
      %s181 = sadd.s32 %s180, 1
      %p184 = scmp.eq.s32.totalorder %s26, 1
      %p185 = scmp.ne.s32.totalorder %s180, %s182
      %p186 = scmp.eq.s32.totalorder %s26, 0
      %p187 = por %p185, %p186
      %p188 = scmp.ne.s32.totalorder %s180, %s182
      %p189 = scmp.eq.s32.totalorder %s31, 1
      %p190 = por %p188, %p189
      %p191 = scmp.ne.s32.totalorder %s182, %s183
      %p192 = scmp.eq.s32.totalorder %s31, 0
      %p193 = por %p191, %p192
      %p194 = scmp.ne.s32.totalorder %s182, %s183
      %p195 = scmp.eq.s32.totalorder %s32, 1
      %p196 = por %p194, %p195
      %p198 = scmp.ne.s32.totalorder %s183, %s197
      %p199 = scmp.eq.s32.totalorder %s32, 0
      %p200 = por %p198, %p199
      %s202 = sadd.s32 %s201, 1
      %p205 = scmp.eq.s32.totalorder %s26, 1
      %p206 = scmp.ne.s32.totalorder %s201, %s203
      %p207 = scmp.eq.s32.totalorder %s26, 0
      %p208 = por %p206, %p207
      %p209 = scmp.ne.s32.totalorder %s201, %s203
      %p210 = scmp.eq.s32.totalorder %s31, 1
      %p211 = por %p209, %p210
      %p212 = scmp.ne.s32.totalorder %s203, %s204
      %p213 = scmp.eq.s32.totalorder %s31, 0
      %p214 = por %p212, %p213
      %p215 = scmp.ne.s32.totalorder %s203, %s204
      %p216 = scmp.eq.s32.totalorder %s32, 1
      %p217 = por %p215, %p216
      %p219 = scmp.ne.s32.totalorder %s204, %s218
      %p220 = scmp.eq.s32.totalorder %s32, 0
      %p221 = por %p219, %p220
      %s223 = sadd.s32 %s222, 1
      %p226 = scmp.eq.s32.totalorder %s26, 1
      %p227 = scmp.ne.s32.totalorder %s222, %s224
      %p228 = scmp.eq.s32.totalorder %s26, 0
      %p229 = por %p227, %p228
      %p230 = scmp.ne.s32.totalorder %s222, %s224
      %p231 = scmp.eq.s32.totalorder %s31, 1
      %p232 = por %p230, %p231
      %p233 = scmp.ne.s32.totalorder %s224, %s225
      %p234 = scmp.eq.s32.totalorder %s31, 0
      %p235 = por %p233, %p234
      %p236 = scmp.ne.s32.totalorder %s224, %s225
      %p237 = scmp.eq.s32.totalorder %s32, 1
      %p238 = por %p236, %p237
      %p240 = scmp.ne.s32.totalorder %s225, %s239
      %p241 = scmp.eq.s32.totalorder %s32, 0
      %p242 = por %p240, %p241
      %s244 = sadd.s32 %s243, 1
      %p247 = scmp.eq.s32.totalorder %s26, 1
      %p248 = scmp.ne.s32.totalorder %s243, %s245
      %p249 = scmp.eq.s32.totalorder %s26, 0
      %p250 = por %p248, %p249
      %p251 = scmp.ne.s32.totalorder %s243, %s245
      %p252 = scmp.eq.s32.totalorder %s31, 1
      %p253 = por %p251, %p252
      %p254 = scmp.ne.s32.totalorder %s245, %s246
      %p255 = scmp.eq.s32.totalorder %s31, 0
      %p256 = por %p254, %p255
      %p257 = scmp.ne.s32.totalorder %s245, %s246
      %p258 = scmp.eq.s32.totalorder %s32, 1
      %p259 = por %p257, %p258
      %p261 = scmp.ne.s32.totalorder %s246, %s260
      %p262 = scmp.eq.s32.totalorder %s32, 0
      %p263 = por %p261, %p262
      %s265 = sadd.s32 %s264, 1
      %p268 = scmp.eq.s32.totalorder %s26, 1
      %p269 = scmp.ne.s32.totalorder %s264, %s266
      %p270 = scmp.eq.s32.totalorder %s26, 0
      %p271 = por %p269, %p270
      %p272 = scmp.ne.s32.totalorder %s264, %s266
      %p273 = scmp.eq.s32.totalorder %s31, 1
      %p274 = por %p272, %p273
      %p275 = scmp.ne.s32.totalorder %s266, %s267
      %p276 = scmp.eq.s32.totalorder %s31, 0
      %p277 = por %p275, %p276
      %p278 = scmp.ne.s32.totalorder %s266, %s267
      %p279 = scmp.eq.s32.totalorder %s32, 1
      %p280 = por %p278, %p279
      %p282 = scmp.ne.s32.totalorder %s267, %s281
      %p283 = scmp.eq.s32.totalorder %s32, 0
      %p284 = por %p282, %p283
      %s285 = ssub.s32 %s26, %s33
      %p286 = scmp.eq.s32.totalorder %s285, 0
      %s288 = sadd.s32 %s287, 1
      %s289 = scalar_select %p286, %s287, %s288
      %p292 = pneg %p286
      %p293 = scmp.eq.s32.totalorder %s26, 1
      %p294 = por %p292, %p293
      %p295 = scmp.ne.s32.totalorder %s287, %s290
      %p296 = scmp.eq.s32.totalorder %s26, 0
      %p297 = por %p295, %p296
      %p298 = scmp.ne.s32.totalorder %s287, %s290
      %p299 = scmp.eq.s32.totalorder %s31, 1
      %p300 = por %p298, %p299
      %p301 = scmp.ne.s32.totalorder %s290, %s291
      %p302 = scmp.eq.s32.totalorder %s31, 0
      %p303 = por %p301, %p302
      %p304 = scmp.ne.s32.totalorder %s290, %s291
      %p305 = scmp.eq.s32.totalorder %s32, 1
      %p306 = por %p304, %p305
      %p308 = scmp.ne.s32.totalorder %s291, %s307
      %p309 = scmp.eq.s32.totalorder %s32, 0
      %p310 = por %p308, %p309
      %s311 = ssub.s32 %s26, %s33
      %p312 = scmp.eq.s32.totalorder %s311, 0
      %s314 = sadd.s32 %s313, 1
      %s315 = scalar_select %p312, %s313, %s314
      %p318 = pneg %p312
      %p319 = scmp.eq.s32.totalorder %s26, 1
      %p320 = por %p318, %p319
      %p321 = scmp.ne.s32.totalorder %s313, %s316
      %p322 = scmp.eq.s32.totalorder %s26, 0
      %p323 = por %p321, %p322
      %p324 = scmp.ne.s32.totalorder %s313, %s316
      %p325 = scmp.eq.s32.totalorder %s31, 1
      %p326 = por %p324, %p325
      %p327 = scmp.ne.s32.totalorder %s316, %s317
      %p328 = scmp.eq.s32.totalorder %s31, 0
      %p329 = por %p327, %p328
      %p330 = scmp.ne.s32.totalorder %s316, %s317
      %p331 = scmp.eq.s32.totalorder %s32, 1
      %p332 = por %p330, %p331
      %p334 = scmp.ne.s32.totalorder %s317, %s333
      %p335 = scmp.eq.s32.totalorder %s32, 0
      %p336 = por %p334, %p335
      %s337 = ssub.s32 %s26, %s33
      %p338 = scmp.eq.s32.totalorder %s337, 0
      %s340 = sadd.s32 %s339, 1
      %s341 = scalar_select %p338, %s339, %s340
      %p344 = pneg %p338
      %p345 = scmp.eq.s32.totalorder %s26, 1
      %p346 = por %p344, %p345
      %p347 = scmp.ne.s32.totalorder %s339, %s342
      %p348 = scmp.eq.s32.totalorder %s26, 0
      %p349 = por %p347, %p348
      %p350 = scmp.ne.s32.totalorder %s339, %s342
      %p351 = scmp.eq.s32.totalorder %s31, 1
      %p352 = por %p350, %p351
      %p353 = scmp.ne.s32.totalorder %s342, %s343
      %p354 = scmp.eq.s32.totalorder %s31, 0
      %p355 = por %p353, %p354
      %p356 = scmp.ne.s32.totalorder %s342, %s343
      %p357 = scmp.eq.s32.totalorder %s32, 1
      %p358 = por %p356, %p357
      %p360 = scmp.ne.s32.totalorder %s343, %s359
      %p361 = scmp.eq.s32.totalorder %s32, 0
      %p362 = por %p360, %p361
      %p363 = scmp.le.s32.totalorder 1, %s26
      %p364 = scmp.lt.s32.totalorder %s26, 3
      %p365 = pnand %p363, %p364
      %p366 = pneg %p365
      // Predicated region
      $region9: #{tpu_custom_call.1} parent=5 // pred_check
        _
      $region10: #{tpu_custom_call.1} parent=5 // pred_check_branch
        %368 = sbr.rel (%p365) target = $region12
      $region11: #{tpu_custom_call.1} parent=5 // pred_region
        %s369 = ssub.s32 %s26, 1
        // Predicated region
        $region13: #{tpu_custom_call.1} parent=11 // pred_check
          %p370 = pneg %p125
        $region14: #{tpu_custom_call.1} parent=11 // pred_check_branch
          %372 = sbr.rel (%p370) target = $region16
        $region15: #{tpu_custom_call.1} parent=11 // pred_region
          _
        $region16: #{tpu_custom_call.1} parent=11 // pred_fallthru
          _
        // Predicated region
        $region17: #{tpu_custom_call.1} parent=11 // pred_check
          %p373 = pneg %p146
        $region18: #{tpu_custom_call.1} parent=11 // pred_check_branch
          %375 = sbr.rel (%p373) target = $region20
        $region19: #{tpu_custom_call.1} parent=11 // pred_region
          _
        $region20: #{tpu_custom_call.1} parent=11 // pred_fallthru
          _
        // Predicated region
        $region21: #{tpu_custom_call.1} parent=11 // pred_check
          %p376 = pneg %p193
        $region22: #{tpu_custom_call.1} parent=11 // pred_check_branch
          %378 = sbr.rel (%p376) target = $region24
        $region23: #{tpu_custom_call.1} parent=11 // pred_region
          _
        $region24: #{tpu_custom_call.1} parent=11 // pred_fallthru
          _
        // Predicated region
        $region25: #{tpu_custom_call.1} parent=11 // pred_check
          %p379 = pneg %p214
        $region26: #{tpu_custom_call.1} parent=11 // pred_check_branch
          %381 = sbr.rel (%p379) target = $region28
        $region27: #{tpu_custom_call.1} parent=11 // pred_region
          _
        $region28: #{tpu_custom_call.1} parent=11 // pred_fallthru
          _
        // Predicated region
        $region29: #{tpu_custom_call.1} parent=11 // pred_check
          %p382 = pneg %p235
        $region30: #{tpu_custom_call.1} parent=11 // pred_check_branch
          %384 = sbr.rel (%p382) target = $region32
        $region31: #{tpu_custom_call.1} parent=11 // pred_region
          _
        $region32: #{tpu_custom_call.1} parent=11 // pred_fallthru
          _
        // Predicated region
        $region33: #{tpu_custom_call.1} parent=11 // pred_check
          %p385 = pneg %p256
        $region34: #{tpu_custom_call.1} parent=11 // pred_check_branch
          %387 = sbr.rel (%p385) target = $region36
        $region35: #{tpu_custom_call.1} parent=11 // pred_region
          _
        $region36: #{tpu_custom_call.1} parent=11 // pred_fallthru
          _
        // Predicated region
        $region37: #{tpu_custom_call.1} parent=11 // pred_check
          %p388 = pneg %p277
        $region38: #{tpu_custom_call.1} parent=11 // pred_check_branch
          %390 = sbr.rel (%p388) target = $region40
        $region39: #{tpu_custom_call.1} parent=11 // pred_region
          _
        $region40: #{tpu_custom_call.1} parent=11 // pred_fallthru
          _
      $region12: #{tpu_custom_call.1} parent=5 // pred_fallthru
        _
      %p391 = scmp.lt.s32.totalorder %s26, 2
      // Predicated region
      $region41: #{tpu_custom_call.1} parent=5 // pred_check
        %p392 = pneg %p391
      $region42: #{tpu_custom_call.1} parent=5 // pred_check_branch
        %394 = sbr.rel (%p392) target = $region44
      $region43: #{tpu_custom_call.1} parent=5 // pred_region
        // Predicated region
        $region45: #{tpu_custom_call.1} parent=43 // pred_check
          %p395 = pneg %p46
        $region46: #{tpu_custom_call.1} parent=43 // pred_check_branch
          %397 = sbr.rel (%p395) target = $region48
        $region47: #{tpu_custom_call.1} parent=43 // pred_region
          %p398 = scmp.lt.s32.totalorder %s26, 1
          %s399 = scalar_select %p398, %s26, 1
          %s400 = smul.addr %s399, 4
          %s401 = scalar_lea.vmem %s0, %s400
        $region48: #{tpu_custom_call.1} parent=43 // pred_fallthru
          _
        // Predicated region
        $region49: #{tpu_custom_call.1} parent=43 // pred_check
          %p402 = pneg %p72
        $region50: #{tpu_custom_call.1} parent=43 // pred_check_branch
          %404 = sbr.rel (%p402) target = $region52
        $region51: #{tpu_custom_call.1} parent=43 // pred_region
          %p405 = scmp.lt.s32.totalorder %s26, 1
          %s406 = scalar_select %p405, %s26, 1
          %s407 = scalar_lea.vmem %s1, %s406
        $region52: #{tpu_custom_call.1} parent=43 // pred_fallthru
          _
        // Predicated region
        $region53: #{tpu_custom_call.1} parent=43 // pred_check
          %p408 = pneg %p98
        $region54: #{tpu_custom_call.1} parent=43 // pred_check_branch
          %410 = sbr.rel (%p408) target = $region56
        $region55: #{tpu_custom_call.1} parent=43 // pred_region
          %p411 = scmp.lt.s32.totalorder %s26, 1
          %s412 = scalar_select %p411, %s26, 1
          %s413 = smul.addr %s412, 8
          %s414 = scalar_lea.vmem %s2, %s413
        $region56: #{tpu_custom_call.1} parent=43 // pred_fallthru
          _
        // Predicated region
        $region57: #{tpu_custom_call.1} parent=43 // pred_check
          %p415 = pneg %p166
        $region58: #{tpu_custom_call.1} parent=43 // pred_check_branch
          %417 = sbr.rel (%p415) target = $region60
        $region59: #{tpu_custom_call.1} parent=43 // pred_region
          %p418 = scmp.lt.s32.totalorder %s26, 1
          %s419 = scalar_select %p418, %s26, 1
          %s420 = smul.addr %s419, 8
          %s421 = smul.addr %s420, 8
          %s422 = scalar_lea.vmem %s5, %s421
        $region60: #{tpu_custom_call.1} parent=43 // pred_fallthru
          _
      $region44: #{tpu_custom_call.1} parent=5 // pred_fallthru
        _
      %p423 = scmp.le.s32.totalorder 1, %s26
      %p424 = scmp.lt.s32.totalorder %s26, 3
      %p425 = pnand %p423, %p424
      %p426 = pneg %p425
      // Predicated region
      $region61: #{tpu_custom_call.1} parent=5 // pred_check
        _
      $region62: #{tpu_custom_call.1} parent=5 // pred_check_branch
        %428 = sbr.rel (%p425) target = $region64
      $region63: #{tpu_custom_call.1} parent=5 // pred_region
        %s429 = ssub.s32 %s26, 1
        %p430 = scmp.lt.s32.totalorder %s31, 1
        %s431 = scalar_select %p430, %s31, 1
        %s432 = smul.addr %s431, 4
        %s433 = scalar_lea.vmem %s0, %s432
        %p434 = pneg %p52
        %p435 = pneg %p49
        %p436 = scmp.lt.s32.totalorder %s31, 1
        %s437 = scalar_select %p436, %s31, 1
        %s438 = scalar_lea.vmem %s1, %s437
        %p439 = pneg %p78
        %p440 = pneg %p75
        %p441 = scmp.lt.s32.totalorder %s31, 1
        %s442 = scalar_select %p441, %s31, 1
        %s443 = smul.addr %s442, 8
        %s444 = scalar_lea.vmem %s2, %s443
        %p445 = pneg %p104
        %p446 = pneg %p101
        %p447 = pneg %p125
        %p448 = pneg %p122
        %p449 = pneg %p146
        %p450 = pneg %p143
        %p451 = scmp.lt.s32.totalorder %s31, 1
        %s452 = scalar_select %p451, %s31, 1
        %s453 = smul.addr %s452, 8
        %s454 = smul.addr %s453, 8
        %s455 = scalar_lea.vmem %s5, %s454
        %p456 = pneg %p172
        %p457 = pneg %p169
        %p458 = pneg %p193
        %p459 = pneg %p190
        %p460 = pneg %p214
        %p461 = pneg %p211
        %p462 = pneg %p235
        %p463 = pneg %p232
        %p464 = pneg %p256
        %p465 = pneg %p253
        %p466 = pneg %p277
        %p467 = pneg %p274
        %p468 = pneg %p303
        %p469 = pneg %p300
        %s470 = sand.u32 %s290, 1
        %s471 = scalar_lea.sflag [#allocation3], %s470
        %s472 = sand.u32 %s290, 1
        %s473 = smul.addr %s472, 8
        %s474 = scalar_lea.vmem [#allocation2], %s473
        %p475 = pneg %p329
        %p476 = pneg %p326
        %s477 = sand.u32 %s31, 1
        %s478 = scalar_lea.sflag [#allocation5], %s477
        %s479 = sand.u32 %s316, 1
        %s480 = smul.addr %s479, 8
        %s481 = scalar_lea.vmem [#allocation4], %s480
        %p482 = pneg %p355
        %p483 = pneg %p352
        %s484 = sand.u32 %s31, 1
        %s485 = scalar_lea.sflag [#allocation5], %s484
        %s486 = sand.u32 %s342, 1
        %s487 = smul.addr %s486, 8
        %s488 = scalar_lea.vmem [#allocation6], %s487
        %p489 = scmp.lt.s32.totalorder %s31, 1
        %s490 = scalar_select %p489, %s31, 1
        %s491 = smul.addr %s490, 4
        %s492 = scalar_lea.vmem %s0, %s491
        %p493 = scmp.lt.s32.totalorder %s31, 1
        %s494 = scalar_select %p493, %s31, 1
        %s495 = scalar_lea.vmem %s1, %s494
        %p496 = scmp.lt.s32.totalorder %s31, 1
        %s497 = scalar_select %p496, %s31, 1
        %s498 = smul.addr %s497, 8
        %s499 = scalar_lea.vmem %s2, %s498
        %p500 = scmp.lt.s32.totalorder %s31, 1
        %s501 = scalar_select %p500, %s31, 1
        %s502 = smul.addr %s501, 8
        %s503 = smul.addr %s502, 8
        %s504 = scalar_lea.vmem %s5, %s503
        %v506 = vld [vmem:[%s495] sm:$0x1]
        %v507 = vld [vmem:[%s492] sm:$0xf]
        %v508 = vld [vmem:[%s3] sm:$0xf]
        %v509 = vld [vmem:[%s3 + $0x4] sm:$0xf]
        %v510 = vld [vmem:[%s3 + $0x8] sm:$0xf]
        %v511 = vld [vmem:[%s3 + $0xc] sm:$0xf]
        %v512 = vld [vmem:[%s4] sm:$0xff]
        %v513 = vld [vmem:[%s4 + $0x8] sm:$0xff]
        %v514 = vld [vmem:[%s4 + $0x10] sm:$0xff]
        %v515 = vld [vmem:[%s4 + $0x18] sm:$0xff]
        %517 = vset.pattern.permute.xlu0 0
        %518 = vperm.xlu0 %517, %v512
        %v519 = vpop.permute.xlu0 %518
        %522 = vset.pattern.permute.xlu0 0
        %523 = vperm.xlu0 %522, %v513
        %v524 = vpop.permute.xlu0 %523
        %527 = vset.pattern.permute.xlu0 0
        %528 = vperm.xlu0 %527, %v514
        %v529 = vpop.permute.xlu0 %528
        %532 = vset.pattern.permute.xlu0 0
        %533 = vperm.xlu0 %532, %v515
        %v534 = vpop.permute.xlu0 %533
        %v540 = vunpack.c.l.b16 %v508
        %v541 = vunpack.c.l.b16 %v509
        %v542 = vunpack.c.l.b16 %v510
        %v543 = vunpack.c.l.b16 %v511
        %v544 = vpack.c.b16 %v541, %v540
        %v545 = vpack.c.b16 %v543, %v542
        %vm546 = vcmask 64512
        %v548 = vsel %vm546, %v544, 0
        %v551 = vsel %vm546, %v545, 0
        %vm553 = vcmask 1043456
        %v555 = vsel %vm553, %v507, 0
        %557 = vmatpush.bf16.msra.mxu0 0
        %558 = vmatpush.bf16.msra.mxu0 0
        %559 = vmatpush.bf16.msra.mxu0 0
        %560 = vmatpush.bf16.msra.mxu0 0
        %561 = vmatpush.bf16.msra.mxu0 0
        %562 = vmatpush.bf16.msra.mxu0 0
        %563 = vmatpush.bf16.msra.mxu0 0
        %564 = vmatpush.bf16.msra.mxu0 %v555
        %565 = vmatmul.bf16.gmra.mxu0 %v548
        %v566 = vpop.f32.mrf.mxu0
        %v567 = vadd.f32 %v519, %v566
        %v568 = vpop.f32.mrf.mxu0
        %v569 = vadd.f32 %v524, %v568
        %570 = vmatmul.bf16.gmra.mxu0 %v551
        %v571 = vpop.f32.mrf.mxu0
        %v572 = vadd.f32 %v529, %v571
        %v573 = vpop.f32.mrf.mxu0
        %v574 = vadd.f32 %v534, %v573
        %575 = vdwg.mxu0
        %v577 = vperm.slane %v506, 0
        %v579 = vmul.f32 %v567, %v577
        %v580 = vmul.f32 %v569, %v577
        %v581 = vmul.f32 %v572, %v577
        %v582 = vmul.f32 %v574, %v577
        %v583 = vld [vmem:[%s504] sm:$0xff]
        %v584 = vld [vmem:[%s504 + $0x8] sm:$0xff]
        %v585 = vld [vmem:[%s504 + $0x10] sm:$0xff]
        %v586 = vld [vmem:[%s504 + $0x18] sm:$0xff]
        %v587 = vld [vmem:[%s504 + $0x20] sm:$0xff]
        %v588 = vld [vmem:[%s504 + $0x28] sm:$0xff]
        %v589 = vld [vmem:[%s504 + $0x30] sm:$0xff]
        %v590 = vld [vmem:[%s504 + $0x38] sm:$0xff]
        %v591 = vpack.c.bf16 %v579, %v579
        %v592 = vpack.c.bf16 %v580, %v580
        %v593 = vpack.c.bf16 %v581, %v581
        %v594 = vpack.c.bf16 %v582, %v582
        %v599 = vunpack.c.l.b16 %v591
        %v600 = vunpack.c.l.b16 %v592
        %v601 = vunpack.c.l.b16 %v593
        %v602 = vunpack.c.l.b16 %v594
        %v603 = vpack.c.b16 %v600, %v599
        %v604 = vpack.c.b16 %v602, %v601
        %605 = vrot.lane.b32.xlu0 %v603, 2
        %v606 = vpop.permute.xlu0 %605
        %607 = vrot.lane.b32.xlu0 %v604, 2
        %v608 = vpop.permute.xlu0 %607
        %vm609 = vcmask 15360
        %v612 = vsel %vm609, 0, %v606
        %v615 = vsel %vm609, 0, %v608
        %617 = vrot.lane.b32.xlu0 %v603, 1
        %v618 = vpop.permute.xlu0 %617
        %619 = vrot.lane.b32.xlu0 %v604, 1
        %v620 = vpop.permute.xlu0 %619
        %vm621 = vcmask 7168
        %v623 = vsel %vm621, 0, %v618
        %v626 = vsel %vm621, 0, %v620
        %628 = vrot.lane.b32.xlu0 %v603, 127
        %v629 = vpop.permute.xlu0 %628
        %630 = vrot.lane.b32.xlu0 %v604, 127
        %v631 = vpop.permute.xlu0 %630
        %vm632 = vcmask 1039360
        %v634 = vsel %vm632, %v629, 0
        %v637 = vsel %vm632, %v631, 0
        %639 = vrot.lane.b32.xlu0 %v603, 126
        %v640 = vpop.permute.xlu0 %639
        %641 = vrot.lane.b32.xlu0 %v604, 126
        %v642 = vpop.permute.xlu0 %641
        %vm643 = vcmask 1031168
        %v645 = vsel %vm643, %v640, 0
        %v648 = vsel %vm643, %v642, 0
        %v652 = vld [vmem:[%s6] sm:$0xff]
        %v653 = vld [vmem:[%s6 + $0x8] sm:$0xff]
        %v654 = vld [vmem:[%s6 + $0x10] sm:$0xff]
        %v655 = vld [vmem:[%s6 + $0x18] sm:$0xff]
        %v656 = vld [vmem:[%s6 + $0x20] sm:$0xff]
        %v657 = vld [vmem:[%s6 + $0x28] sm:$0xff]
        %v658 = vld [vmem:[%s6 + $0x30] sm:$0xff]
        %v659 = vld [vmem:[%s6 + $0x38] sm:$0xff]
        %661 = vset.pattern.permute.xlu0 0
        %662 = vperm.xlu0 %661, %v583
        %v663 = vpop.permute.xlu0 %662
        %666 = vset.pattern.permute.xlu0 0
        %667 = vperm.xlu0 %666, %v584
        %v668 = vpop.permute.xlu0 %667
        %671 = vset.pattern.permute.xlu0 0
        %672 = vperm.xlu0 %671, %v585
        %v673 = vpop.permute.xlu0 %672
        %676 = vset.pattern.permute.xlu0 0
        %677 = vperm.xlu0 %676, %v586
        %v678 = vpop.permute.xlu0 %677
        %681 = vset.pattern.permute.xlu0 0
        %682 = vperm.xlu0 %681, %v587
        %v683 = vpop.permute.xlu0 %682
        %686 = vset.pattern.permute.xlu0 0
        %687 = vperm.xlu0 %686, %v588
        %v688 = vpop.permute.xlu0 %687
        %691 = vset.pattern.permute.xlu0 0
        %692 = vperm.xlu0 %691, %v589
        %v693 = vpop.permute.xlu0 %692
        %696 = vset.pattern.permute.xlu0 0
        %697 = vperm.xlu0 %696, %v590
        %v698 = vpop.permute.xlu0 %697
        %v708 = vunpack.c.l.b16 %v652
        %v709 = vunpack.c.h.b16 %v652
        %v710 = vunpack.c.l.b16 %v653
        %v711 = vunpack.c.h.b16 %v653
        %v712 = vunpack.c.l.b16 %v654
        %v713 = vunpack.c.h.b16 %v654
        %v714 = vunpack.c.l.b16 %v655
        %v715 = vunpack.c.h.b16 %v655
        %v716 = vunpack.c.l.b16 %v656
        %v717 = vunpack.c.h.b16 %v656
        %v718 = vunpack.c.l.b16 %v657
        %v719 = vunpack.c.h.b16 %v657
        %v720 = vunpack.c.l.b16 %v658
        %v721 = vunpack.c.h.b16 %v658
        %v722 = vunpack.c.l.b16 %v659
        %v723 = vunpack.c.h.b16 %v659
        %v724 = vpack.c.b16 %v710, %v708
        %v725 = vpack.c.b16 %v711, %v709
        %v726 = vpack.c.b16 %v714, %v712
        %v727 = vpack.c.b16 %v715, %v713
        %v728 = vpack.c.b16 %v718, %v716
        %v729 = vpack.c.b16 %v719, %v717
        %v730 = vpack.c.b16 %v722, %v720
        %v731 = vpack.c.b16 %v723, %v721
        %vm736 = vcmask 261120
        %v738 = vsel %vm736, %v725, 0
        %v741 = vsel %vm736, %v727, 0
        %v744 = vsel %vm736, %v729, 0
        %v747 = vsel %vm736, %v731, 0
        %749 = vmatpush.bf16.msra.mxu0 %v637
        %750 = vmatpush.bf16.msra.mxu0 %v634
        %751 = vmatpush.bf16.msra.mxu0 %v604
        %752 = vmatpush.bf16.msra.mxu0 %v603
        %753 = vmatpush.bf16.msra.mxu0 %v626
        %754 = vmatpush.bf16.msra.mxu0 %v623
        %755 = vmatpush.bf16.msra.mxu0 %v615
        %756 = vmatpush.bf16.msra.mxu0 %v612
        %757 = vmatmul.bf16.gmra.mxu0 %v724
        %v758 = vpop.f32.mrf.mxu0
        %v759 = vadd.f32 %v663, %v758
        %v760 = vpop.f32.mrf.mxu0
        %v761 = vadd.f32 %v668, %v760
        %762 = vmatmul.bf16.gmra.mxu0 %v726
        %v763 = vpop.f32.mrf.mxu0
        %v764 = vadd.f32 %v673, %v763
        %v765 = vpop.f32.mrf.mxu0
        %v766 = vadd.f32 %v678, %v765
        %767 = vmatmul.bf16.gmra.mxu0 %v728
        %v768 = vpop.f32.mrf.mxu0
        %v769 = vadd.f32 %v683, %v768
        %v770 = vpop.f32.mrf.mxu0
        %v771 = vadd.f32 %v688, %v770
        %772 = vmatmul.bf16.gmra.mxu0 %v730
        %v773 = vpop.f32.mrf.mxu0
        %v774 = vadd.f32 %v693, %v773
        %v775 = vpop.f32.mrf.mxu0
        %v776 = vadd.f32 %v698, %v775
        %777 = vdwg.mxu0
        %778 = vmatpush.bf16.msra.mxu0 0
        %779 = vmatpush.bf16.msra.mxu0 0
        %780 = vmatpush.bf16.msra.mxu0 0
        %781 = vmatpush.bf16.msra.mxu0 0
        %782 = vmatpush.bf16.msra.mxu0 0
        %783 = vmatpush.bf16.msra.mxu0 0
        %784 = vmatpush.bf16.msra.mxu0 %v648
        %785 = vmatpush.bf16.msra.mxu0 %v645
        %786 = vmatmul.bf16.gmra.mxu0 %v738
        %v787 = vpop.f32.mrf.mxu0
        %v788 = vadd.f32 %v759, %v787
        %v789 = vpop.f32.mrf.mxu0
        %v790 = vadd.f32 %v761, %v789
        %791 = vmatmul.bf16.gmra.mxu0 %v741
        %v792 = vpop.f32.mrf.mxu0
        %v793 = vadd.f32 %v764, %v792
        %v794 = vpop.f32.mrf.mxu0
        %v795 = vadd.f32 %v766, %v794
        %796 = vmatmul.bf16.gmra.mxu0 %v744
        %v797 = vpop.f32.mrf.mxu0
        %v798 = vadd.f32 %v769, %v797
        %v799 = vpop.f32.mrf.mxu0
        %v800 = vadd.f32 %v771, %v799
        %801 = vmatmul.bf16.gmra.mxu0 %v747
        %v802 = vpop.f32.mrf.mxu0
        %v803 = vadd.f32 %v774, %v802
        %v804 = vpop.f32.mrf.mxu0
        %v805 = vadd.f32 %v776, %v804
        %806 = vdwg.mxu0
        %v807 = vtanh.pop %v788
        %v808 = vtanh.pop %v790
        %v809 = vtanh.pop %v793
        %v810 = vtanh.pop %v795
        %v811 = vxor.u32 %v798, 2147483648
        %v812 = vxor.u32 %v800, 2147483648
        %v813 = vxor.u32 %v803, 2147483648
        %v814 = vxor.u32 %v805, 2147483648
        %v815 = vmul.f32 %v811, 1.442695
        %v816 = vpow.pop %v815
        %v817 = vmul.f32 %v812, 1.442695
        %v818 = vpow.pop %v817
        %v819 = vmul.f32 %v813, 1.442695
        %v820 = vpow.pop %v819
        %v821 = vmul.f32 %v814, 1.442695
        %v822 = vpow.pop %v821
        %v823 = vadd.f32 %v816, 1.0
        %v824 = vadd.f32 %v818, 1.0
        %v825 = vadd.f32 %v820, 1.0
        %v826 = vadd.f32 %v822, 1.0
        %v827 = vrcp.pop %v823
        %v828 = vmul.f32 %v823, %v827
        %v829 = vsub.f32 1.0, %v828
        %v830 = vmul.f32 %v827, %v829
        %v831 = vadd.f32 %v827, %v830
        %vm832 = vweird.f32 %v823
        %vm833 = vweird.f32 %v827
        %vm834 = vmor %vm832, %vm833
        %v835 = vsel %vm834, %v827, %v831
        %v836 = vand.u32 2147483647, %v823
        %vm837 = vcmp.eq.f32.partialorder %v836, 8.507059e+37
        %v838 = vand.u32 %v823, 2147483648
        %v839 = vor.u32 1.1754944e-38, %v838
        %v840 = vsel %vm837, %v839, %v835
        %v841 = vmul.f32 1.0, %v840
        %v842 = vrcp.pop %v824
        %v843 = vmul.f32 %v824, %v842
        %v844 = vsub.f32 1.0, %v843
        %v845 = vmul.f32 %v842, %v844
        %v846 = vadd.f32 %v842, %v845
        %vm847 = vweird.f32 %v824
        %vm848 = vweird.f32 %v842
        %vm849 = vmor %vm847, %vm848
        %v850 = vsel %vm849, %v842, %v846
        %v851 = vand.u32 2147483647, %v824
        %vm852 = vcmp.eq.f32.partialorder %v851, 8.507059e+37
        %v853 = vand.u32 %v824, 2147483648
        %v854 = vor.u32 1.1754944e-38, %v853
        %v855 = vsel %vm852, %v854, %v850
        %v856 = vmul.f32 1.0, %v855
        %v857 = vrcp.pop %v825
        %v858 = vmul.f32 %v825, %v857
        %v859 = vsub.f32 1.0, %v858
        %v860 = vmul.f32 %v857, %v859
        %v861 = vadd.f32 %v857, %v860
        %vm862 = vweird.f32 %v825
        %vm863 = vweird.f32 %v857
        %vm864 = vmor %vm862, %vm863
        %v865 = vsel %vm864, %v857, %v861
        %v866 = vand.u32 2147483647, %v825
        %vm867 = vcmp.eq.f32.partialorder %v866, 8.507059e+37
        %v868 = vand.u32 %v825, 2147483648
        %v869 = vor.u32 1.1754944e-38, %v868
        %v870 = vsel %vm867, %v869, %v865
        %v871 = vmul.f32 1.0, %v870
        %v872 = vrcp.pop %v826
        %v873 = vmul.f32 %v826, %v872
        %v874 = vsub.f32 1.0, %v873
        %v875 = vmul.f32 %v872, %v874
        %v876 = vadd.f32 %v872, %v875
        %vm877 = vweird.f32 %v826
        %vm878 = vweird.f32 %v872
        %vm879 = vmor %vm877, %vm878
        %v880 = vsel %vm879, %v872, %v876
        %v881 = vand.u32 2147483647, %v826
        %vm882 = vcmp.eq.f32.partialorder %v881, 8.507059e+37
        %v883 = vand.u32 %v826, 2147483648
        %v884 = vor.u32 1.1754944e-38, %v883
        %v885 = vsel %vm882, %v884, %v880
        %v886 = vmul.f32 1.0, %v885
        %v887 = vmul.f32 %v807, %v841
        %v888 = vmul.f32 %v808, %v856
        %v889 = vmul.f32 %v809, %v871
        %v890 = vmul.f32 %v810, %v886
        %v891 = vpack.c.bf16 %v888, %v887
        %v892 = vpack.c.bf16 %v890, %v889
        %v893 = vld [vmem:[%s7] sm:$0xf]
        %v894 = vld [vmem:[%s7 + $0x4] sm:$0xf]
        %v895 = vld [vmem:[%s7 + $0x8] sm:$0xf]
        %v896 = vld [vmem:[%s7 + $0xc] sm:$0xf]
        %v897 = vld [vmem:[%s7 + $0x10] sm:$0xf]
        %v898 = vld [vmem:[%s7 + $0x14] sm:$0xf]
        %v899 = vld [vmem:[%s7 + $0x18] sm:$0xf]
        %v900 = vld [vmem:[%s7 + $0x1c] sm:$0xf]
        %v909 = vunpack.c.l.b16 %v893
        %v910 = vunpack.c.l.b16 %v894
        %v911 = vunpack.c.l.b16 %v895
        %v912 = vunpack.c.l.b16 %v896
        %v913 = vunpack.c.l.b16 %v897
        %v914 = vunpack.c.l.b16 %v898
        %v915 = vunpack.c.l.b16 %v899
        %v916 = vunpack.c.l.b16 %v900
        %v917 = vpack.c.b16 %v910, %v909
        %v918 = vpack.c.b16 %v912, %v911
        %v919 = vpack.c.b16 %v914, %v913
        %v920 = vpack.c.b16 %v916, %v915
        %v922 = vsel %vm736, %v917, 0
        %v925 = vsel %vm736, %v918, 0
        %v928 = vsel %vm736, %v919, 0
        %v931 = vsel %vm736, %v920, 0
        %933 = vmatpush.bf16.msra.mxu0 0
        %934 = vmatpush.bf16.msra.mxu0 0
        %935 = vmatpush.bf16.msra.mxu0 0
        %936 = vmatpush.bf16.msra.mxu0 0
        %937 = vmatpush.bf16.msra.mxu0 0
        %938 = vmatpush.bf16.msra.mxu0 0
        %939 = vmatpush.bf16.msra.mxu0 %v892
        %940 = vmatpush.bf16.msra.mxu0 %v891
        %941 = vmatmul.bf16.gmra.mxu0 %v922
        %v942 = vpop.f32.mrf.mxu0
        %v943 = vadd.f32 0.0, %v942
        %v944 = vpop.f32.mrf.mxu0
        %v945 = vadd.f32 0.0, %v944
        %946 = vmatmul.bf16.gmra.mxu0 %v925
        %v947 = vpop.f32.mrf.mxu0
        %v948 = vadd.f32 0.0, %v947
        %v949 = vpop.f32.mrf.mxu0
        %v950 = vadd.f32 0.0, %v949
        %951 = vmatmul.bf16.gmra.mxu0 %v928
        %v952 = vpop.f32.mrf.mxu0
        %v953 = vadd.f32 0.0, %v952
        %v954 = vpop.f32.mrf.mxu0
        %v955 = vadd.f32 0.0, %v954
        %956 = vmatmul.bf16.gmra.mxu0 %v931
        %v957 = vpop.f32.mrf.mxu0
        %v958 = vadd.f32 0.0, %v957
        %v959 = vpop.f32.mrf.mxu0
        %v960 = vadd.f32 0.0, %v959
        %961 = vdwg.mxu0
        %v962 = vadd.f32 %v579, %v943
        %v963 = vadd.f32 %v580, %v945
        %v964 = vadd.f32 %v581, %v948
        %v965 = vadd.f32 %v582, %v950
        %v966 = vmul.f32 %v962, %v577
        %v967 = vmul.f32 %v963, %v577
        %v968 = vmul.f32 %v964, %v577
        %v969 = vmul.f32 %v965, %v577
        %v970 = vpack.c.bf16 %v966, %v966
        %v971 = vpack.c.bf16 %v967, %v967
        %v972 = vpack.c.bf16 %v968, %v968
        %v973 = vpack.c.bf16 %v969, %v969
        %v978 = vunpack.c.l.b16 %v970
        %v979 = vunpack.c.l.b16 %v971
        %v980 = vunpack.c.l.b16 %v972
        %v981 = vunpack.c.l.b16 %v973
        %v982 = vpack.c.b16 %v979, %v978
        %v983 = vpack.c.b16 %v981, %v980
        %984 = vrot.lane.b32.xlu0 %v982, 4
        %v985 = vpop.permute.xlu0 %984
        %986 = vrot.lane.b32.xlu0 %v983, 4
        %v987 = vpop.permute.xlu0 %986
        %vm988 = vcmask 31744
        %v990 = vsel %vm988, 0, %v985
        %v993 = vsel %vm988, 0, %v987
        %995 = vrot.lane.b32.xlu0 %v982, 2
        %v996 = vpop.permute.xlu0 %995
        %997 = vrot.lane.b32.xlu0 %v983, 2
        %v998 = vpop.permute.xlu0 %997
        %v1000 = vsel %vm609, 0, %v996
        %v1003 = vsel %vm609, 0, %v998
        %1005 = vrot.lane.b32.xlu0 %v982, 126
        %v1006 = vpop.permute.xlu0 %1005
        %1007 = vrot.lane.b32.xlu0 %v983, 126
        %v1008 = vpop.permute.xlu0 %1007
        %v1010 = vsel %vm643, %v1006, 0
        %v1013 = vsel %vm643, %v1008, 0
        %1015 = vrot.lane.b32.xlu0 %v982, 124
        %v1016 = vpop.permute.xlu0 %1015
        %1017 = vrot.lane.b32.xlu0 %v983, 124
        %v1018 = vpop.permute.xlu0 %1017
        %vm1019 = vcmask 1014784
        %v1021 = vsel %vm1019, %v1016, 0
        %v1024 = vsel %vm1019, %v1018, 0
        %s1028 = scalar_lea.vmem %s6, 64
        %v1029 = vld [vmem:[%s1028] sm:$0xff]
        %v1030 = vld [vmem:[%s1028 + $0x8] sm:$0xff]
        %v1031 = vld [vmem:[%s1028 + $0x10] sm:$0xff]
        %v1032 = vld [vmem:[%s1028 + $0x18] sm:$0xff]
        %v1033 = vld [vmem:[%s1028 + $0x20] sm:$0xff]
        %v1034 = vld [vmem:[%s1028 + $0x28] sm:$0xff]
        %v1035 = vld [vmem:[%s1028 + $0x30] sm:$0xff]
        %v1036 = vld [vmem:[%s1028 + $0x38] sm:$0xff]
        %1037 = vset.pattern.permute.xlu0 1
        %1038 = vperm.xlu0 %1037, %v583
        %v1039 = vpop.permute.xlu0 %1038
        %1041 = vset.pattern.permute.xlu0 1
        %1042 = vperm.xlu0 %1041, %v584
        %v1043 = vpop.permute.xlu0 %1042
        %1045 = vset.pattern.permute.xlu0 1
        %1046 = vperm.xlu0 %1045, %v585
        %v1047 = vpop.permute.xlu0 %1046
        %1049 = vset.pattern.permute.xlu0 1
        %1050 = vperm.xlu0 %1049, %v586
        %v1051 = vpop.permute.xlu0 %1050
        %1053 = vset.pattern.permute.xlu0 1
        %1054 = vperm.xlu0 %1053, %v587
        %v1055 = vpop.permute.xlu0 %1054
        %1057 = vset.pattern.permute.xlu0 1
        %1058 = vperm.xlu0 %1057, %v588
        %v1059 = vpop.permute.xlu0 %1058
        %1061 = vset.pattern.permute.xlu0 1
        %1062 = vperm.xlu0 %1061, %v589
        %v1063 = vpop.permute.xlu0 %1062
        %1065 = vset.pattern.permute.xlu0 1
        %1066 = vperm.xlu0 %1065, %v590
        %v1067 = vpop.permute.xlu0 %1066
        %v1077 = vunpack.c.l.b16 %v1029
        %v1078 = vunpack.c.h.b16 %v1029
        %v1079 = vunpack.c.l.b16 %v1030
        %v1080 = vunpack.c.h.b16 %v1030
        %v1081 = vunpack.c.l.b16 %v1031
        %v1082 = vunpack.c.h.b16 %v1031
        %v1083 = vunpack.c.l.b16 %v1032
        %v1084 = vunpack.c.h.b16 %v1032
        %v1085 = vunpack.c.l.b16 %v1033
        %v1086 = vunpack.c.h.b16 %v1033
        %v1087 = vunpack.c.l.b16 %v1034
        %v1088 = vunpack.c.h.b16 %v1034
        %v1089 = vunpack.c.l.b16 %v1035
        %v1090 = vunpack.c.h.b16 %v1035
        %v1091 = vunpack.c.l.b16 %v1036
        %v1092 = vunpack.c.h.b16 %v1036
        %v1093 = vpack.c.b16 %v1079, %v1077
        %v1094 = vpack.c.b16 %v1080, %v1078
        %v1095 = vpack.c.b16 %v1083, %v1081
        %v1096 = vpack.c.b16 %v1084, %v1082
        %v1097 = vpack.c.b16 %v1087, %v1085
        %v1098 = vpack.c.b16 %v1088, %v1086
        %v1099 = vpack.c.b16 %v1091, %v1089
        %v1100 = vpack.c.b16 %v1092, %v1090
        %v1106 = vsel %vm736, %v1094, 0
        %v1109 = vsel %vm736, %v1096, 0
        %v1112 = vsel %vm736, %v1098, 0
        %v1115 = vsel %vm736, %v1100, 0
        %1117 = vmatpush.bf16.msra.mxu0 %v1013
        %1118 = vmatpush.bf16.msra.mxu0 %v1010
        %1119 = vmatpush.bf16.msra.mxu0 %v983
        %1120 = vmatpush.bf16.msra.mxu0 %v982
        %1121 = vmatpush.bf16.msra.mxu0 %v1003
        %1122 = vmatpush.bf16.msra.mxu0 %v1000
        %1123 = vmatpush.bf16.msra.mxu0 %v993
        %1124 = vmatpush.bf16.msra.mxu0 %v990
        %1125 = vmatmul.bf16.gmra.mxu0 %v1093
        %v1126 = vpop.f32.mrf.mxu0
        %v1127 = vadd.f32 %v1039, %v1126
        %v1128 = vpop.f32.mrf.mxu0
        %v1129 = vadd.f32 %v1043, %v1128
        %1130 = vmatmul.bf16.gmra.mxu0 %v1095
        %v1131 = vpop.f32.mrf.mxu0
        %v1132 = vadd.f32 %v1047, %v1131
        %v1133 = vpop.f32.mrf.mxu0
        %v1134 = vadd.f32 %v1051, %v1133
        %1135 = vmatmul.bf16.gmra.mxu0 %v1097
        %v1136 = vpop.f32.mrf.mxu0
        %v1137 = vadd.f32 %v1055, %v1136
        %v1138 = vpop.f32.mrf.mxu0
        %v1139 = vadd.f32 %v1059, %v1138
        %1140 = vmatmul.bf16.gmra.mxu0 %v1099
        %v1141 = vpop.f32.mrf.mxu0
        %v1142 = vadd.f32 %v1063, %v1141
        %v1143 = vpop.f32.mrf.mxu0
        %v1144 = vadd.f32 %v1067, %v1143
        %1145 = vdwg.mxu0
        %1146 = vmatpush.bf16.msra.mxu0 0
        %1147 = vmatpush.bf16.msra.mxu0 0
        %1148 = vmatpush.bf16.msra.mxu0 0
        %1149 = vmatpush.bf16.msra.mxu0 0
        %1150 = vmatpush.bf16.msra.mxu0 0
        %1151 = vmatpush.bf16.msra.mxu0 0
        %1152 = vmatpush.bf16.msra.mxu0 %v1024
        %1153 = vmatpush.bf16.msra.mxu0 %v1021
        %1154 = vmatmul.bf16.gmra.mxu0 %v1106
        %v1155 = vpop.f32.mrf.mxu0
        %v1156 = vadd.f32 %v1127, %v1155
        %v1157 = vpop.f32.mrf.mxu0
        %v1158 = vadd.f32 %v1129, %v1157
        %1159 = vmatmul.bf16.gmra.mxu0 %v1109
        %v1160 = vpop.f32.mrf.mxu0
        %v1161 = vadd.f32 %v1132, %v1160
        %v1162 = vpop.f32.mrf.mxu0
        %v1163 = vadd.f32 %v1134, %v1162
        %1164 = vmatmul.bf16.gmra.mxu0 %v1112
        %v1165 = vpop.f32.mrf.mxu0
        %v1166 = vadd.f32 %v1137, %v1165
        %v1167 = vpop.f32.mrf.mxu0
        %v1168 = vadd.f32 %v1139, %v1167
        %1169 = vmatmul.bf16.gmra.mxu0 %v1115
        %v1170 = vpop.f32.mrf.mxu0
        %v1171 = vadd.f32 %v1142, %v1170
        %v1172 = vpop.f32.mrf.mxu0
        %v1173 = vadd.f32 %v1144, %v1172
        %1174 = vdwg.mxu0
        %v1175 = vtanh.pop %v1156
        %v1176 = vtanh.pop %v1158
        %v1177 = vtanh.pop %v1161
        %v1178 = vtanh.pop %v1163
        %v1179 = vxor.u32 %v1166, 2147483648
        %v1180 = vxor.u32 %v1168, 2147483648
        %v1181 = vxor.u32 %v1171, 2147483648
        %v1182 = vxor.u32 %v1173, 2147483648
        %v1183 = vmul.f32 %v1179, 1.442695
        %v1184 = vpow.pop %v1183
        %v1185 = vmul.f32 %v1180, 1.442695
        %v1186 = vpow.pop %v1185
        %v1187 = vmul.f32 %v1181, 1.442695
        %v1188 = vpow.pop %v1187
        %v1189 = vmul.f32 %v1182, 1.442695
        %v1190 = vpow.pop %v1189
        %v1191 = vadd.f32 %v1184, 1.0
        %v1192 = vadd.f32 %v1186, 1.0
        %v1193 = vadd.f32 %v1188, 1.0
        %v1194 = vadd.f32 %v1190, 1.0
        %v1195 = vrcp.pop %v1191
        %v1196 = vmul.f32 %v1191, %v1195
        %v1197 = vsub.f32 1.0, %v1196
        %v1198 = vmul.f32 %v1195, %v1197
        %v1199 = vadd.f32 %v1195, %v1198
        %vm1200 = vweird.f32 %v1191
        %vm1201 = vweird.f32 %v1195
        %vm1202 = vmor %vm1200, %vm1201
        %v1203 = vsel %vm1202, %v1195, %v1199
        %v1204 = vand.u32 2147483647, %v1191
        %vm1205 = vcmp.eq.f32.partialorder %v1204, 8.507059e+37
        %v1206 = vand.u32 %v1191, 2147483648
        %v1207 = vor.u32 1.1754944e-38, %v1206
        %v1208 = vsel %vm1205, %v1207, %v1203
        %v1209 = vmul.f32 1.0, %v1208
        %v1210 = vrcp.pop %v1192
        %v1211 = vmul.f32 %v1192, %v1210
        %v1212 = vsub.f32 1.0, %v1211
        %v1213 = vmul.f32 %v1210, %v1212
        %v1214 = vadd.f32 %v1210, %v1213
        %vm1215 = vweird.f32 %v1192
        %vm1216 = vweird.f32 %v1210
        %vm1217 = vmor %vm1215, %vm1216
        %v1218 = vsel %vm1217, %v1210, %v1214
        %v1219 = vand.u32 2147483647, %v1192
        %vm1220 = vcmp.eq.f32.partialorder %v1219, 8.507059e+37
        %v1221 = vand.u32 %v1192, 2147483648
        %v1222 = vor.u32 1.1754944e-38, %v1221
        %v1223 = vsel %vm1220, %v1222, %v1218
        %v1224 = vmul.f32 1.0, %v1223
        %v1225 = vrcp.pop %v1193
        %v1226 = vmul.f32 %v1193, %v1225
        %v1227 = vsub.f32 1.0, %v1226
        %v1228 = vmul.f32 %v1225, %v1227
        %v1229 = vadd.f32 %v1225, %v1228
        %vm1230 = vweird.f32 %v1193
        %vm1231 = vweird.f32 %v1225
        %vm1232 = vmor %vm1230, %vm1231
        %v1233 = vsel %vm1232, %v1225, %v1229
        %v1234 = vand.u32 2147483647, %v1193
        %vm1235 = vcmp.eq.f32.partialorder %v1234, 8.507059e+37
        %v1236 = vand.u32 %v1193, 2147483648
        %v1237 = vor.u32 1.1754944e-38, %v1236
        %v1238 = vsel %vm1235, %v1237, %v1233
        %v1239 = vmul.f32 1.0, %v1238
        %v1240 = vrcp.pop %v1194
        %v1241 = vmul.f32 %v1194, %v1240
        %v1242 = vsub.f32 1.0, %v1241
        %v1243 = vmul.f32 %v1240, %v1242
        %v1244 = vadd.f32 %v1240, %v1243
        %vm1245 = vweird.f32 %v1194
        %vm1246 = vweird.f32 %v1240
        %vm1247 = vmor %vm1245, %vm1246
        %v1248 = vsel %vm1247, %v1240, %v1244
        %v1249 = vand.u32 2147483647, %v1194
        %vm1250 = vcmp.eq.f32.partialorder %v1249, 8.507059e+37
        %v1251 = vand.u32 %v1194, 2147483648
        %v1252 = vor.u32 1.1754944e-38, %v1251
        %v1253 = vsel %vm1250, %v1252, %v1248
        %v1254 = vmul.f32 1.0, %v1253
        %v1255 = vmul.f32 %v1175, %v1209
        %v1256 = vmul.f32 %v1176, %v1224
        %v1257 = vmul.f32 %v1177, %v1239
        %v1258 = vmul.f32 %v1178, %v1254
        %v1259 = vpack.c.bf16 %v1256, %v1255
        %v1260 = vpack.c.bf16 %v1258, %v1257
        %v1261 = vld [vmem:[%s8] sm:$0xf]
        %v1262 = vld [vmem:[%s8 + $0x4] sm:$0xf]
        %v1263 = vld [vmem:[%s8 + $0x8] sm:$0xf]
        %v1264 = vld [vmem:[%s8 + $0xc] sm:$0xf]
        %v1269 = vunpack.c.l.b16 %v1261
        %v1270 = vunpack.c.l.b16 %v1262
        %v1271 = vunpack.c.l.b16 %v1263
        %v1272 = vunpack.c.l.b16 %v1264
        %v1273 = vpack.c.b16 %v1270, %v1269
        %v1274 = vpack.c.b16 %v1272, %v1271
        %v1276 = vsel %vm736, %v1273, 0
        %v1279 = vsel %vm736, %v1274, 0
        %1281 = vmatpush.bf16.msra.mxu0 0
        %1282 = vmatpush.bf16.msra.mxu0 0
        %1283 = vmatpush.bf16.msra.mxu0 0
        %1284 = vmatpush.bf16.msra.mxu0 0
        %1285 = vmatpush.bf16.msra.mxu0 0
        %1286 = vmatpush.bf16.msra.mxu0 0
        %1287 = vmatpush.bf16.msra.mxu0 %v1260
        %1288 = vmatpush.bf16.msra.mxu0 %v1259
        %1289 = vmatmul.bf16.gmra.mxu0 %v1276
        %v1290 = vpop.f32.mrf.mxu0
        %v1291 = vadd.f32 0.0, %v1290
        %v1292 = vpop.f32.mrf.mxu0
        %v1293 = vadd.f32 0.0, %v1292
        %1294 = vmatmul.bf16.gmra.mxu0 %v1279
        %v1295 = vpop.f32.mrf.mxu0
        %v1296 = vadd.f32 0.0, %v1295
        %v1297 = vpop.f32.mrf.mxu0
        %v1298 = vadd.f32 0.0, %v1297
        %1299 = vdwg.mxu0
        %v1300 = vadd.f32 %v953, %v1291
        %v1301 = vadd.f32 %v955, %v1293
        %v1302 = vadd.f32 %v958, %v1296
        %v1303 = vadd.f32 %v960, %v1298
        %v1304 = vmul.f32 %v1300, %v577
        %v1305 = vmul.f32 %v1301, %v577
        %v1306 = vmul.f32 %v1302, %v577
        %v1307 = vmul.f32 %v1303, %v577
        %v1308 = vpack.c.bf16 %v1305, %v1304
        %v1309 = vpack.c.bf16 %v1307, %v1306
        %v1310 = vld [vmem:[%s9] sm:$0xf]
        %v1311 = vld [vmem:[%s9 + $0x4] sm:$0xf]
        %v1312 = vld [vmem:[%s10] sm:$0xff]
        %v1313 = vld [vmem:[%s10 + $0x8] sm:$0xff]
        %1315 = vset.pattern.permute.xlu0 0
        %1316 = vperm.xlu0 %1315, %v1312
        %v1317 = vpop.permute.xlu0 %1316
        %1320 = vset.pattern.permute.xlu0 0
        %1321 = vperm.xlu0 %1320, %v1313
        %v1322 = vpop.permute.xlu0 %1321
        %v1326 = vunpack.c.l.b16 %v1310
        %v1327 = vunpack.c.l.b16 %v1311
        %v1328 = vpack.c.b16 %v1327, %v1326
        %v1330 = vsel %vm736, %v1328, 0
        %1332 = vmatpush.bf16.msra.mxu0 0
        %1333 = vmatpush.bf16.msra.mxu0 0
        %1334 = vmatpush.bf16.msra.mxu0 0
        %1335 = vmatpush.bf16.msra.mxu0 0
        %1336 = vmatpush.bf16.msra.mxu0 0
        %1337 = vmatpush.bf16.msra.mxu0 0
        %1338 = vmatpush.bf16.msra.mxu0 %v1309
        %1339 = vmatpush.bf16.msra.mxu0 %v1308
        %1340 = vmatmul.bf16.gmra.mxu0 %v1330
        %v1341 = vpop.f32.mrf.mxu0
        %v1342 = vadd.f32 %v1317, %v1341
        %v1343 = vpop.f32.mrf.mxu0
        %v1344 = vadd.f32 %v1322, %v1343
        %1345 = vdwg.mxu0
        %v1346 = vmul.f32 %v1342, %v577
        %v1347 = vmul.f32 %v1344, %v577
        %v1348 = vld [vmem:[%s499] sm:$0xff]
        %v1349 = vmul.f32 %v1347, 1.442695
        %v1350 = vpow.pop %v1349
        %v1351 = vmul.f32 %v1348, %v1350
        %v1352 = vadd.f32 %v1346, %v1351
        %v1353 = vmul.f32 %v1352, %v577
        %1354 = vst [vmem:[%s474] sm:$0xff] %v1353
        %1355 = vst [vmem:[%s481] sm:$0xff] %v1346
        %1356 = vst [vmem:[%s488] sm:$0xff] %v1347
        %s1357 = sand.u32 %s290, 1
        %s1358 = scalar_lea.sflag [#allocation3], %s1357
        %s1359 = sand.u32 %s290, 1
        %s1360 = smul.addr %s1359, 8
        %s1361 = scalar_lea.vmem [#allocation2], %s1360
        %s1362 = sand.u32 %s31, 1
        %s1363 = scalar_lea.sflag [#allocation5], %s1362
        %s1364 = sand.u32 %s316, 1
        %s1365 = smul.addr %s1364, 8
        %s1366 = scalar_lea.vmem [#allocation4], %s1365
        %s1367 = sand.u32 %s31, 1
        %s1368 = scalar_lea.sflag [#allocation5], %s1367
        %s1369 = sand.u32 %s342, 1
        %s1370 = smul.addr %s1369, 8
        %s1371 = scalar_lea.vmem [#allocation6], %s1370
        // Predicated region
        $region65: #{tpu_custom_call.1} parent=63 // pred_check
          %p1372 = pneg %p300
        $region66: #{tpu_custom_call.1} parent=63 // pred_check_branch
          %1374 = sbr.rel (%p1372) target = $region68
        $region67: #{tpu_custom_call.1} parent=63 // pred_region
          %1376 = vsyncadd %s1358, 0
          %s1377 = smul.addr %s31, 8
          %s1378 = scalar_lea.hbm %s11, %s1377
          %s1380 = sshll.u32 %s1361, 4
          %s1381 = int_to_ptr.vmem [resolvable:$true] %s1380
          %s1382 = sshll.u32 %s1378, 4
          %s1383 = int_to_ptr.hbm [resolvable:$true] %s1382
          %1385 = dma.vmem_to_hbm [thread:$0]  %s1381, 128, %s1383, %s1358
        $region68: #{tpu_custom_call.1} parent=63 // pred_fallthru
          _
        // Predicated region
        $region69: #{tpu_custom_call.1} parent=63 // pred_check
          %p1386 = pneg %p326
        $region70: #{tpu_custom_call.1} parent=63 // pred_check_branch
          %1388 = sbr.rel (%p1386) target = $region72
        $region71: #{tpu_custom_call.1} parent=63 // pred_region
          %1390 = vsyncadd %s1363, 0
          %s1391 = smul.addr %s31, 8
          %s1392 = scalar_lea.hbm %s12, %s1391
          %s1394 = sshll.u32 %s1366, 4
          %s1395 = int_to_ptr.vmem [resolvable:$true] %s1394
          %s1396 = sshll.u32 %s1392, 4
          %s1397 = int_to_ptr.hbm [resolvable:$true] %s1396
          %1399 = dma.vmem_to_hbm [thread:$0]  %s1395, 128, %s1397, %s1363
        $region72: #{tpu_custom_call.1} parent=63 // pred_fallthru
          _
        // Predicated region
        $region73: #{tpu_custom_call.1} parent=63 // pred_check
          %p1400 = pneg %p352
        $region74: #{tpu_custom_call.1} parent=63 // pred_check_branch
          %1402 = sbr.rel (%p1400) target = $region76
        $region75: #{tpu_custom_call.1} parent=63 // pred_region
          %1404 = vsyncadd %s1368, 0
          %s1405 = smul.addr %s31, 8
          %s1406 = scalar_lea.hbm %s13, %s1405
          %s1408 = sshll.u32 %s1371, 4
          %s1409 = int_to_ptr.vmem [resolvable:$true] %s1408
          %s1410 = sshll.u32 %s1406, 4
          %s1411 = int_to_ptr.hbm [resolvable:$true] %s1410
          %1413 = dma.vmem_to_hbm [thread:$0]  %s1409, 128, %s1411, %s1368
        $region76: #{tpu_custom_call.1} parent=63 // pred_fallthru
          _
      $region64: #{tpu_custom_call.1} parent=5 // pred_fallthru
        _
      %p1414 = scmp.le.s32.totalorder 2, %s26
      // Predicated region
      $region77: #{tpu_custom_call.1} parent=5 // pred_check
        %p1415 = pneg %p1414
      $region78: #{tpu_custom_call.1} parent=5 // pred_check_branch
        %1417 = sbr.rel (%p1415) target = $region80
      $region79: #{tpu_custom_call.1} parent=5 // pred_region
        %s1418 = ssub.s32 %s26, 2
        // Predicated region
        $region81: #{tpu_custom_call.1} parent=79 // pred_check
          %p1419 = pneg %p306
        $region82: #{tpu_custom_call.1} parent=79 // pred_check_branch
          %1421 = sbr.rel (%p1419) target = $region84
        $region83: #{tpu_custom_call.1} parent=79 // pred_region
          %s1422 = sand.u32 %s291, 1
          %s1423 = scalar_lea.sflag [#allocation3], %s1422
          %s1424 = sand.u32 %s291, 1
          %s1425 = smul.addr %s1424, 8
          %s1426 = scalar_lea.vmem [#allocation2], %s1425
          %1428 = dma.done %s1423, 128
        $region84: #{tpu_custom_call.1} parent=79 // pred_fallthru
          _
        // Predicated region
        $region85: #{tpu_custom_call.1} parent=79 // pred_check
          %p1429 = pneg %p332
        $region86: #{tpu_custom_call.1} parent=79 // pred_check_branch
          %1431 = sbr.rel (%p1429) target = $region88
        $region87: #{tpu_custom_call.1} parent=79 // pred_region
          %s1432 = sand.u32 %s32, 1
          %s1433 = scalar_lea.sflag [#allocation5], %s1432
          %s1434 = sand.u32 %s317, 1
          %s1435 = smul.addr %s1434, 8
          %s1436 = scalar_lea.vmem [#allocation4], %s1435
          %1438 = dma.done %s1433, 128
        $region88: #{tpu_custom_call.1} parent=79 // pred_fallthru
          _
        // Predicated region
        $region89: #{tpu_custom_call.1} parent=79 // pred_check
          %p1439 = pneg %p358
        $region90: #{tpu_custom_call.1} parent=79 // pred_check_branch
          %1441 = sbr.rel (%p1439) target = $region92
        $region91: #{tpu_custom_call.1} parent=79 // pred_region
          %s1442 = sand.u32 %s32, 1
          %s1443 = scalar_lea.sflag [#allocation5], %s1442
          %s1444 = sand.u32 %s343, 1
          %s1445 = smul.addr %s1444, 8
          %s1446 = scalar_lea.vmem [#allocation6], %s1445
          %1448 = dma.done %s1443, 128
        $region92: #{tpu_custom_call.1} parent=79 // pred_fallthru
          _
      $region80: #{tpu_custom_call.1} parent=5 // pred_fallthru
        _
    $region6: #{tpu_custom_call.1} parent=1 // loop_footer
      %s30 = sadd.s32 1, %s26
    $region7: #{tpu_custom_call.1} parent=1 // loop_footer_branch
      %25 = sbr.rel target = $region3
    $region8: #{tpu_custom_call.1} parent=1 // loop_exit
      _
    %1449 = vsyncpa [#allocation3], 1
    %s1450 = scalar_lea.sflag [#allocation3], 1
    %1451 = vsyncpa %s1450, 1
    %1452 = vsyncpa [#allocation5], 1
    %s1453 = scalar_lea.sflag [#allocation5], 1
    %1454 = vsyncpa %s1453, 1

</llo_original>
